<compile_context>
chip_gen: v7x
topology: tpu7x:2x2x1
jax: 0.10.0
libtpu: 0.0.40
codegen_flags: <defaults>
</compile_context>

<pallas_src>
import functools

import jax
import jax.numpy as jnp
import numpy as np
from jax.experimental import pallas as pl
from jax.experimental.pallas import tpu as pltpu


def _lstm_stack_step(inp, h_all, c_all, w_ih0_ref, w_ih_rest_ref, w_hh_ref,
                     b_lstm_ref, n_layers):
    """One LSTM time step through the stacked layers.

    inp:   (B, E) f32 activations feeding layer 0
    h_all: (L, B, H) f32,  c_all: (L, B, H) f32
    Weight refs hold bf16 (fed straight to the MXU); biases are f32.
    Returns (top_h, [h_l], [c_l]) in f32.
    """
    f32, bf16 = jnp.float32, jnp.bfloat16
    H = h_all.shape[-1]

    # Hoisted recurrent contribution for every layer (independent of the serial
    # layer chain): one batched MXU contraction, bf16 x bf16 -> f32 accumulate.
    hh = jnp.einsum("lbh,lhg->lbg", h_all.astype(bf16), w_hh_ref[...],
                    preferred_element_type=f32)              # (L, B, 4H)
    b_all = b_lstm_ref[...]                                   # (L, 1, 4H) f32

    hs, cs = [], []
    x = inp
    for l in range(n_layers):
        w_ih = w_ih0_ref[...] if l == 0 else w_ih_rest_ref[l - 1]   # bf16
        gates = (jnp.dot(x.astype(bf16), w_ih, preferred_element_type=f32)
                 + hh[l] + b_all[l])                          # (B, 4H) f32
        # PyTorch gate order: input, forget, cell(g), output.
        # Slices are lane-aligned because H % 128 == 0 (asserted in wrappers).
        i_g = jax.nn.sigmoid(gates[:, 0 * H:1 * H])
        f_g = jax.nn.sigmoid(gates[:, 1 * H:2 * H])
        g_g = jnp.tanh(gates[:, 2 * H:3 * H])
        o_g = jax.nn.sigmoid(gates[:, 3 * H:4 * H])
        c_new = f_g * c_all[l] + i_g * g_g
        h_new = o_g * jnp.tanh(c_new)
        hs.append(h_new)
        cs.append(c_new)
        x = h_new                     # inter-layer dropout == identity (eval)
    return x, hs, cs


def _make_decoder_kernel(n_layers):
    """Single decode step (matches Decoder.forward, eval-mode dropout)."""
    def kernel(*refs):
        it = iter(refs)
        x_ref, h_ref, c_ref = next(it), next(it), next(it)
        w_emb_ref, b_emb_ref, w_ih0_ref = next(it), next(it), next(it)
        w_ih_rest_ref = next(it) if n_layers > 1 else None
        w_hh_ref, b_lstm_ref = next(it), next(it)
        w_out_ref, b_out_ref = next(it), next(it)
        pred_ref, h_out_ref, c_out_ref = next(it), next(it), next(it)

        f32, bf16 = jnp.float32, jnp.bfloat16

        # embedding: relu(x @ W_emb + b); dropout == identity (eval)
        emb = (jnp.dot(x_ref[...].astype(bf16), w_emb_ref[...],
                       preferred_element_type=f32) + b_emb_ref[...])
        inp = jnp.maximum(emb, 0.0)

        # Read the full state once up front (makes in-place aliasing safe).
        h_all = h_ref[...]
        c_all = c_ref[...]
        top, hs, cs = _lstm_stack_step(inp, h_all, c_all, w_ih0_ref,
                                       w_ih_rest_ref, w_hh_ref, b_lstm_ref,
                                       n_layers)
        for l in range(n_layers):
            h_out_ref[l] = hs[l]
            c_out_ref[l] = cs[l]

        pred_ref[...] = (jnp.dot(top.astype(bf16), w_out_ref[...],
                                 preferred_element_type=f32) + b_out_ref[...])
    return kernel


def _make_decode_kernel(n_layers):
    """T autoregressive decode steps folded into one pallas_call (grid=(T,)):
    weights DMA'd once and VMEM-resident; h/c carried in resident output
    blocks; the fed-back prediction lives in VMEM scratch."""
    def kernel(*refs):
        it = iter(refs)
        x0_ref, h_ref, c_ref = next(it), next(it), next(it)
        w_emb_ref, b_emb_ref, w_ih0_ref = next(it), next(it), next(it)
        w_ih_rest_ref = next(it) if n_layers > 1 else None
        w_hh_ref, b_lstm_ref = next(it), next(it)
        w_out_ref, b_out_ref = next(it), next(it)
        pred_seq_ref, h_out_ref, c_out_ref = next(it), next(it), next(it)
        x_scr = next(it)                                   # (B, OUT) f32 scratch

        t = pl.program_id(0)

        @pl.when(t == 0)
        def _():
            x_scr[...] = x0_ref[...]
            h_out_ref[...] = h_ref[...]
            c_out_ref[...] = c_ref[...]

        f32, bf16 = jnp.float32, jnp.bfloat16

        emb = (jnp.dot(x_scr[...].astype(bf16), w_emb_ref[...],
                       preferred_element_type=f32) + b_emb_ref[...])
        inp = jnp.maximum(emb, 0.0)

        h_all = h_out_ref[...]        # carried state (read-before-write)
        c_all = c_out_ref[...]
        top, hs, cs = _lstm_stack_step(inp, h_all, c_all, w_ih0_ref,
                                       w_ih_rest_ref, w_hh_ref, b_lstm_ref,
                                       n_layers)
        for l in range(n_layers):
            h_out_ref[l] = hs[l]
            c_out_ref[l] = cs[l]

        pred = (jnp.dot(top.astype(bf16), w_out_ref[...],
                        preferred_element_type=f32) + b_out_ref[...])
        pred_seq_ref[0] = pred
        x_scr[...] = pred             # feed prediction back as next-step input
    return kernel


def pack_params(raw, n_layers, weight_dtype=jnp.bfloat16):
    """Stack per-layer LSTM params host-side; large weights in bf16, biases f32.
    raw["b_lstm"][l] is the pre-summed PyTorch (b_ih + b_hh)."""
    packed = {
        "w_emb": raw["w_emb"].astype(weight_dtype),
        "b_emb": raw["b_emb"].astype(jnp.float32),
        "w_ih0": raw["w_ih"][0].astype(weight_dtype),
        "w_hh": jnp.stack(raw["w_hh"]).astype(weight_dtype),
        "b_lstm": jnp.stack(raw["b_lstm"]).astype(jnp.float32),
        "w_out": raw["w_out"].astype(weight_dtype),
        "b_out": raw["b_out"].astype(jnp.float32),
    }
    if n_layers > 1:
        packed["w_ih_rest"] = jnp.stack(raw["w_ih"][1:]).astype(weight_dtype)
    return packed


def _gather_inputs(x, hidden, cell, params, n_layers):
    inputs = [x, hidden, cell, params["w_emb"], params["b_emb"], params["w_ih0"]]
    if n_layers > 1:
        inputs.append(params["w_ih_rest"])
    inputs += [params["w_hh"], params["b_lstm"], params["w_out"], params["b_out"]]
    return inputs


def decoder_forward(x, hidden, cell, params, *, n_layers):
    """Single step: (x, h, c) -> (prediction, h', c'), eval-mode dropout."""
    B, out_sz = x.shape
    L, Bh, H = hidden.shape
    assert L == n_layers and Bh == B
    assert H % 128 == 0, "gate slices must stay lane-aligned (H % 128 == 0)"

    inputs = _gather_inputs(x, hidden, cell, params, n_layers)
    vmem = pl.BlockSpec(memory_space=pltpu.MemorySpace.VMEM)
    out_shape = (
        jax.ShapeDtypeStruct((B, out_sz), jnp.float32),    # prediction
        jax.ShapeDtypeStruct((L, B, H), jnp.float32),      # new hidden
        jax.ShapeDtypeStruct((L, B, H), jnp.float32),      # new cell
    )
    return pl.pallas_call(
        _make_decoder_kernel(n_layers),
        out_shape=out_shape,
        in_specs=[vmem] * len(inputs),
        out_specs=(vmem, vmem, vmem),
        input_output_aliases={1: 1, 2: 2},   # update h/c state in place
    )(*inputs)


def decoder_decode(x0, hidden, cell, params, *, n_layers, n_steps):
    """n_steps autoregressive steps (x_{t+1} = prediction_t) in one kernel call;
    weights stay VMEM-resident across the whole token loop."""
    B, out_sz = x0.shape
    L, Bh, H = hidden.shape
    assert L == n_layers and Bh == B
    assert H % 128 == 0, "gate slices must stay lane-aligned (H % 128 == 0)"

    inputs = _gather_inputs(x0, hidden, cell, params, n_layers)

    def const_index_map(ndim):
        zeros = (0,) * ndim
        return lambda t: zeros

    in_specs = [pl.BlockSpec(a.shape, const_index_map(a.ndim)) for a in inputs]
    out_shape = (
        jax.ShapeDtypeStruct((n_steps, B, out_sz), jnp.float32),
        jax.ShapeDtypeStruct((L, B, H), jnp.float32),
        jax.ShapeDtypeStruct((L, B, H), jnp.float32),
    )
    out_specs = (
        pl.BlockSpec((1, B, out_sz), lambda t: (t, 0, 0)),   # per-step pred
        pl.BlockSpec((L, B, H), lambda t: (0, 0, 0)),        # resident h carry
        pl.BlockSpec((L, B, H), lambda t: (0, 0, 0)),        # resident c carry
    )
    return pl.pallas_call(
        _make_decode_kernel(n_layers),
        out_shape=out_shape,
        grid=(n_steps,),
        in_specs=in_specs,
        out_specs=out_specs,
        scratch_shapes=[pltpu.VMEM((B, out_sz), jnp.float32)],
        input_output_aliases={1: 1, 2: 2},
        compiler_params=pltpu.CompilerParams(
            dimension_semantics=("arbitrary",)),
    )(*inputs)


# ------------------------- pure-JAX references ------------------------------
def ref_step(x, hidden, cell, packed, *, n_layers):
    """Mirrors the PyTorch forward (eval mode) with the same bf16 MXU feed."""
    f32, bf16 = jnp.float32, jnp.bfloat16
    H = hidden.shape[-1]
    emb = jnp.maximum(jnp.dot(x.astype(bf16), packed["w_emb"],
                              preferred_element_type=f32) + packed["b_emb"], 0.0)
    inp = emb
    hs, cs = [], []
    for l in range(n_layers):
        w_ih = packed["w_ih0"] if l == 0 else packed["w_ih_rest"][l - 1]
        gates = (jnp.dot(inp.astype(bf16), w_ih, preferred_element_type=f32)
                 + jnp.dot(hidden[l].astype(bf16), packed["w_hh"][l],
                           preferred_element_type=f32)
                 + packed["b_lstm"][l])
        i_g = jax.nn.sigmoid(gates[:, 0 * H:1 * H])
        f_g = jax.nn.sigmoid(gates[:, 1 * H:2 * H])
        g_g = jnp.tanh(gates[:, 2 * H:3 * H])
        o_g = jax.nn.sigmoid(gates[:, 3 * H:4 * H])
        c_new = f_g * cell[l] + i_g * g_g
        h_new = o_g * jnp.tanh(c_new)
        hs.append(h_new)
        cs.append(c_new)
        inp = h_new
    pred = jnp.dot(inp.astype(bf16), packed["w_out"],
                   preferred_element_type=f32) + packed["b_out"]
    return pred, jnp.stack(hs), jnp.stack(cs)


def ref_decode(x0, hidden, cell, packed, *, n_layers, n_steps):
    preds = []
    x, h, c = x0, hidden, cell
    for _ in range(n_steps):
        p, h, c = ref_step(x, h, c, packed, n_layers=n_layers)
        preds.append(p)
        x = p
    return jnp.stack(preds), h, c


if __name__ == "__main__":
    # Small shapes consistent with Decoder(output_size, ..., embedding_size,
    # hidden_size, n_layers).  H=128 keeps gate slices lane-aligned.
    B = 8      # batch
    OUT = 6    # output_size
    E = 64     # embedding_size
    H = 128    # hidden_size
    L = 2      # n_layers
    T = 4      # decode steps for the fused token-loop kernel

    key = jax.random.PRNGKey(0)
    ks = jax.random.split(key, 20)
    scale = 0.1

    raw = {
        "w_emb": scale * jax.random.normal(ks[0], (OUT, E), jnp.float32),
        "b_emb": scale * jax.random.normal(ks[1], (1, E), jnp.float32),
        # layer 0 input size = E, layers 1.. input size = H
        "w_ih": [scale * jax.random.normal(ks[2 + l], (E if l == 0 else H, 4 * H),
                                           jnp.float32) for l in range(L)],
        "w_hh": [scale * jax.random.normal(ks[6 + l], (H, 4 * H), jnp.float32)
                 for l in range(L)],
        # PyTorch has b_ih + b_hh; stored pre-summed here (equivalent)
        "b_lstm": [scale * jax.random.normal(ks[10 + l], (1, 4 * H), jnp.float32)
                   for l in range(L)],
        "w_out": scale * jax.random.normal(ks[14], (H, OUT), jnp.float32),
        "b_out": scale * jax.random.normal(ks[15], (1, OUT), jnp.float32),
    }

    x = jax.random.normal(ks[16], (B, OUT), jnp.float32)
    hidden = jax.random.normal(ks[17], (L, B, H), jnp.float32)
    cell = jax.random.normal(ks[18], (L, B, H), jnp.float32)

    packed = pack_params(raw, L)

    # References first (same bf16-rounded weights, same bf16 MXU feed).
    pred_r, h_r, c_r = ref_step(x, hidden, cell, packed, n_layers=L)
    seq_r, hT_r, cT_r = ref_decode(x, hidden, cell, packed, n_layers=L, n_steps=T)

    # Single-step kernel (module's forward semantics).
    step_fn = jax.jit(functools.partial(decoder_forward, n_layers=L))
    pred, h_new, c_new = jax.block_until_ready(step_fn(x, hidden, cell, packed))

    # Fused multi-token decode kernel (weights VMEM-resident across T steps).
    decode_fn = jax.jit(functools.partial(decoder_decode, n_layers=L, n_steps=T))
    seq, hT, cT = jax.block_until_ready(decode_fn(x, hidden, cell, packed))

    # bf16 matmul inputs -> looser tolerances than a pure-f32 comparison.
    np.testing.assert_allclose(np.asarray(pred), np.asarray(pred_r), rtol=1e-2, atol=1e-3)
    np.testing.assert_allclose(np.asarray(h_new), np.asarray(h_r), rtol=1e-2, atol=1e-3)
    np.testing.assert_allclose(np.asarray(c_new), np.asarray(c_r), rtol=1e-2, atol=1e-3)
    np.testing.assert_allclose(np.asarray(seq), np.asarray(seq_r), rtol=1e-2, atol=1e-3)
    np.testing.assert_allclose(np.asarray(hT), np.asarray(hT_r), rtol=1e-2, atol=1e-3)
    np.testing.assert_allclose(np.asarray(cT), np.asarray(cT_r), rtol=1e-2, atol=1e-3)

    print("KERNEL_OK")
</pallas_src>

<mosaic_0001>
module attributes {stable_mosaic.version = 11 : i64} {
  func.func @kernel(%arg0: memref<8x6xf32, #tpu.memory_space<vmem>>, %arg1: memref<2x8x128xf32, #tpu.memory_space<vmem>>, %arg2: memref<2x8x128xf32, #tpu.memory_space<vmem>>, %arg3: memref<6x64xbf16, #tpu.memory_space<vmem>>, %arg4: memref<1x64xf32, #tpu.memory_space<vmem>>, %arg5: memref<64x512xbf16, #tpu.memory_space<vmem>>, %arg6: memref<1x128x512xbf16, #tpu.memory_space<vmem>>, %arg7: memref<2x128x512xbf16, #tpu.memory_space<vmem>>, %arg8: memref<2x1x512xf32, #tpu.memory_space<vmem>>, %arg9: memref<128x6xbf16, #tpu.memory_space<vmem>>, %arg10: memref<1x6xf32, #tpu.memory_space<vmem>>, %arg11: memref<8x6xf32, #tpu.memory_space<vmem>>, %arg12: memref<2x8x128xf32, #tpu.memory_space<vmem>>, %arg13: memref<2x8x128xf32, #tpu.memory_space<vmem>>) attributes {dimension_semantics = [], scalar_prefetch = 0 : i64, scratch_operands = 0 : i64, tpu.core_type = #tpu.core_type<tc>} {
    %c0 = arith.constant 0 : index
    %c0_0 = arith.constant 0 : index
    %0 = vector.load %arg0[%c0, %c0_0] : memref<8x6xf32, #tpu.memory_space<vmem>>, vector<8x6xf32>
    %1 = arith.truncf %0 : vector<8x6xf32> to vector<8x6xbf16>
    %c0_1 = arith.constant 0 : index
    %c0_2 = arith.constant 0 : index
    %2 = vector.load %arg3[%c0_1, %c0_2] : memref<6x64xbf16, #tpu.memory_space<vmem>>, vector<6x64xbf16>
    %cst = arith.constant dense<0.000000e+00> : vector<8x64xf32>
    %3 = tpu.matmul %1, %2, %cst {dimension_numbers = #tpu.dot_dimension_numbers<[1], [0], [0], [1], [0, 0, 1, 1], [], []>} : vector<8x6xbf16>, vector<6x64xbf16>, vector<8x64xf32> -> vector<8x64xf32>
    %c0_3 = arith.constant 0 : index
    %c0_4 = arith.constant 0 : index
    %4 = vector.load %arg4[%c0_3, %c0_4] : memref<1x64xf32, #tpu.memory_space<vmem>>, vector<1x64xf32>
    %5 = vector.broadcast %4 : vector<1x64xf32> to vector<8x64xf32>
    %6 = arith.addf %3, %5 : vector<8x64xf32>
    %cst_5 = arith.constant 0.000000e+00 : f32
    %7 = vector.broadcast %cst_5 : f32 to vector<8x64xf32>
    %8 = arith.maximumf %6, %7 : vector<8x64xf32>
    %c0_6 = arith.constant 0 : index
    %c0_7 = arith.constant 0 : index
    %c0_8 = arith.constant 0 : index
    %9 = vector.load %arg1[%c0_6, %c0_7, %c0_8] : memref<2x8x128xf32, #tpu.memory_space<vmem>>, vector<2x8x128xf32>
    %c0_9 = arith.constant 0 : index
    %c0_10 = arith.constant 0 : index
    %c0_11 = arith.constant 0 : index
    %10 = vector.load %arg2[%c0_9, %c0_10, %c0_11] : memref<2x8x128xf32, #tpu.memory_space<vmem>>, vector<2x8x128xf32>
    %11 = arith.truncf %9 : vector<2x8x128xf32> to vector<2x8x128xbf16>
    %c0_12 = arith.constant 0 : index
    %c0_13 = arith.constant 0 : index
    %c0_14 = arith.constant 0 : index
    %12 = vector.load %arg7[%c0_12, %c0_13, %c0_14] : memref<2x128x512xbf16, #tpu.memory_space<vmem>>, vector<2x128x512xbf16>
    "tpu.trace_start"() <{level = 10 : i32, message = "lbh,lhg->lbg"}> : () -> ()
    %cst_15 = arith.constant dense<0.000000e+00> : vector<2x8x512xf32>
    %13 = tpu.matmul %11, %12, %cst_15 {dimension_numbers = #tpu.dot_dimension_numbers<[2], [1], [1], [2], [0, 0, 0, 1, 1, 2], [0], [0]>} : vector<2x8x128xbf16>, vector<2x128x512xbf16>, vector<2x8x512xf32> -> vector<2x8x512xf32>
    "tpu.trace_stop"() : () -> ()
    %c0_16 = arith.constant 0 : index
    %c0_17 = arith.constant 0 : index
    %c0_18 = arith.constant 0 : index
    %14 = vector.load %arg8[%c0_16, %c0_17, %c0_18] : memref<2x1x512xf32, #tpu.memory_space<vmem>>, vector<2x1x512xf32>
    %c0_19 = arith.constant 0 : index
    %c0_20 = arith.constant 0 : index
    %15 = vector.load %arg5[%c0_19, %c0_20] : memref<64x512xbf16, #tpu.memory_space<vmem>>, vector<64x512xbf16>
    %16 = arith.truncf %8 : vector<8x64xf32> to vector<8x64xbf16>
    %cst_21 = arith.constant dense<0.000000e+00> : vector<8x512xf32>
    %17 = tpu.matmul %16, %15, %cst_21 {dimension_numbers = #tpu.dot_dimension_numbers<[1], [0], [0], [1], [0, 0, 1, 1], [], []>} : vector<8x64xbf16>, vector<64x512xbf16>, vector<8x512xf32> -> vector<8x512xf32>
    %18 = vector.extract_strided_slice %13 {offsets = [0, 0, 0], sizes = [1, 8, 512], strides = [1, 1, 1]} : vector<2x8x512xf32> to vector<1x8x512xf32>
    %19 = vector.shape_cast %18 : vector<1x8x512xf32> to vector<8x512xf32>
    %20 = arith.addf %17, %19 : vector<8x512xf32>
    %21 = vector.extract_strided_slice %14 {offsets = [0, 0, 0], sizes = [1, 1, 512], strides = [1, 1, 1]} : vector<2x1x512xf32> to vector<1x1x512xf32>
    %22 = vector.shape_cast %21 : vector<1x1x512xf32> to vector<1x512xf32>
    %23 = vector.broadcast %22 : vector<1x512xf32> to vector<8x512xf32>
    %24 = arith.addf %20, %23 : vector<8x512xf32>
    %25 = vector.extract_strided_slice %24 {offsets = [0, 0], sizes = [8, 128], strides = [1, 1]} : vector<8x512xf32> to vector<8x128xf32>
    %26 = arith.negf %25 : vector<8x128xf32>
    %27 = math.exp %26 : vector<8x128xf32>
    %cst_22 = arith.constant 1.000000e+00 : f32
    %28 = vector.broadcast %cst_22 : f32 to vector<8x128xf32>
    %29 = arith.addf %28, %27 : vector<8x128xf32>
    %30 = arith.divf %28, %29 : vector<8x128xf32>
    %31 = vector.extract_strided_slice %24 {offsets = [0, 128], sizes = [8, 128], strides = [1, 1]} : vector<8x512xf32> to vector<8x128xf32>
    %32 = arith.negf %31 : vector<8x128xf32>
    %33 = math.exp %32 : vector<8x128xf32>
    %cst_23 = arith.constant 1.000000e+00 : f32
    %34 = vector.broadcast %cst_23 : f32 to vector<8x128xf32>
    %35 = arith.addf %34, %33 : vector<8x128xf32>
    %36 = arith.divf %34, %35 : vector<8x128xf32>
    %37 = vector.extract_strided_slice %24 {offsets = [0, 256], sizes = [8, 128], strides = [1, 1]} : vector<8x512xf32> to vector<8x128xf32>
    %38 = math.tanh %37 : vector<8x128xf32>
    %39 = vector.extract_strided_slice %24 {offsets = [0, 384], sizes = [8, 128], strides = [1, 1]} : vector<8x512xf32> to vector<8x128xf32>
    %40 = arith.negf %39 : vector<8x128xf32>
    %41 = math.exp %40 : vector<8x128xf32>
    %cst_24 = arith.constant 1.000000e+00 : f32
    %42 = vector.broadcast %cst_24 : f32 to vector<8x128xf32>
    %43 = arith.addf %42, %41 : vector<8x128xf32>
    %44 = arith.divf %42, %43 : vector<8x128xf32>
    %45 = vector.extract_strided_slice %10 {offsets = [0, 0, 0], sizes = [1, 8, 128], strides = [1, 1, 1]} : vector<2x8x128xf32> to vector<1x8x128xf32>
    %46 = vector.shape_cast %45 : vector<1x8x128xf32> to vector<8x128xf32>
    %47 = arith.mulf %36, %46 : vector<8x128xf32>
    %48 = arith.mulf %30, %38 : vector<8x128xf32>
    %49 = arith.addf %47, %48 : vector<8x128xf32>
    %50 = math.tanh %49 : vector<8x128xf32>
    %51 = arith.mulf %44, %50 : vector<8x128xf32>
    %c0_25 = arith.constant 0 : index
    %c0_26 = arith.constant 0 : index
    %c0_27 = arith.constant 0 : index
    %52 = vector.load %arg6[%c0_25, %c0_26, %c0_27] : memref<1x128x512xbf16, #tpu.memory_space<vmem>>, vector<1x128x512xbf16>
    %53 = vector.shape_cast %52 : vector<1x128x512xbf16> to vector<128x512xbf16>
    %54 = arith.truncf %51 : vector<8x128xf32> to vector<8x128xbf16>
    %cst_28 = arith.constant dense<0.000000e+00> : vector<8x512xf32>
    %55 = tpu.matmul %54, %53, %cst_28 {dimension_numbers = #tpu.dot_dimension_numbers<[1], [0], [0], [1], [0, 0, 1, 1], [], []>} : vector<8x128xbf16>, vector<128x512xbf16>, vector<8x512xf32> -> vector<8x512xf32>
    %56 = vector.extract_strided_slice %13 {offsets = [1, 0, 0], sizes = [1, 8, 512], strides = [1, 1, 1]} : vector<2x8x512xf32> to vector<1x8x512xf32>
    %57 = vector.shape_cast %56 : vector<1x8x512xf32> to vector<8x512xf32>
    %58 = arith.addf %55, %57 : vector<8x512xf32>
    %59 = vector.extract_strided_slice %14 {offsets = [1, 0, 0], sizes = [1, 1, 512], strides = [1, 1, 1]} : vector<2x1x512xf32> to vector<1x1x512xf32>
    %60 = vector.shape_cast %59 : vector<1x1x512xf32> to vector<1x512xf32>
    %61 = vector.broadcast %60 : vector<1x512xf32> to vector<8x512xf32>
    %62 = arith.addf %58, %61 : vector<8x512xf32>
    %63 = vector.extract_strided_slice %62 {offsets = [0, 0], sizes = [8, 128], strides = [1, 1]} : vector<8x512xf32> to vector<8x128xf32>
    %64 = arith.negf %63 : vector<8x128xf32>
    %65 = math.exp %64 : vector<8x128xf32>
    %cst_29 = arith.constant 1.000000e+00 : f32
    %66 = vector.broadcast %cst_29 : f32 to vector<8x128xf32>
    %67 = arith.addf %66, %65 : vector<8x128xf32>
    %68 = arith.divf %66, %67 : vector<8x128xf32>
    %69 = vector.extract_strided_slice %62 {offsets = [0, 128], sizes = [8, 128], strides = [1, 1]} : vector<8x512xf32> to vector<8x128xf32>
    %70 = arith.negf %69 : vector<8x128xf32>
    %71 = math.exp %70 : vector<8x128xf32>
    %cst_30 = arith.constant 1.000000e+00 : f32
    %72 = vector.broadcast %cst_30 : f32 to vector<8x128xf32>
    %73 = arith.addf %72, %71 : vector<8x128xf32>
    %74 = arith.divf %72, %73 : vector<8x128xf32>
    %75 = vector.extract_strided_slice %62 {offsets = [0, 256], sizes = [8, 128], strides = [1, 1]} : vector<8x512xf32> to vector<8x128xf32>
    %76 = math.tanh %75 : vector<8x128xf32>
    %77 = vector.extract_strided_slice %62 {offsets = [0, 384], sizes = [8, 128], strides = [1, 1]} : vector<8x512xf32> to vector<8x128xf32>
    %78 = arith.negf %77 : vector<8x128xf32>
    %79 = math.exp %78 : vector<8x128xf32>
    %cst_31 = arith.constant 1.000000e+00 : f32
    %80 = vector.broadcast %cst_31 : f32 to vector<8x128xf32>
    %81 = arith.addf %80, %79 : vector<8x128xf32>
    %82 = arith.divf %80, %81 : vector<8x128xf32>
    %83 = vector.extract_strided_slice %10 {offsets = [1, 0, 0], sizes = [1, 8, 128], strides = [1, 1, 1]} : vector<2x8x128xf32> to vector<1x8x128xf32>
    %84 = vector.shape_cast %83 : vector<1x8x128xf32> to vector<8x128xf32>
    %85 = arith.mulf %74, %84 : vector<8x128xf32>
    %86 = arith.mulf %68, %76 : vector<8x128xf32>
    %87 = arith.addf %85, %86 : vector<8x128xf32>
    %88 = math.tanh %87 : vector<8x128xf32>
    %89 = arith.mulf %82, %88 : vector<8x128xf32>
    %c0_32 = arith.constant 0 : index
    %c0_33 = arith.constant 0 : index
    %c0_34 = arith.constant 0 : index
    %90 = vector.load %arg12[%c0_32, %c0_33, %c0_34] : memref<2x8x128xf32, #tpu.memory_space<vmem>>, vector<1x8x128xf32>
    %91 = vector.shape_cast %90 : vector<1x8x128xf32> to vector<8x128xf32>
    %92 = vector.shape_cast %51 : vector<8x128xf32> to vector<1x8x128xf32>
    tpu.vector_store %arg12[%c0_32, %c0_33, %c0_34], %92 {strides = array<i32>} : memref<2x8x128xf32, #tpu.memory_space<vmem>>, vector<1x8x128xf32>,
    %c0_35 = arith.constant 0 : index
    %c0_36 = arith.constant 0 : index
    %c0_37 = arith.constant 0 : index
    %93 = vector.load %arg13[%c0_35, %c0_36, %c0_37] : memref<2x8x128xf32, #tpu.memory_space<vmem>>, vector<1x8x128xf32>
    %94 = vector.shape_cast %93 : vector<1x8x128xf32> to vector<8x128xf32>
    %95 = vector.shape_cast %49 : vector<8x128xf32> to vector<1x8x128xf32>
    tpu.vector_store %arg13[%c0_35, %c0_36, %c0_37], %95 {strides = array<i32>} : memref<2x8x128xf32, #tpu.memory_space<vmem>>, vector<1x8x128xf32>,
    %c1 = arith.constant 1 : index
    %c0_38 = arith.constant 0 : index
    %c0_39 = arith.constant 0 : index
    %96 = vector.load %arg12[%c1, %c0_38, %c0_39] : memref<2x8x128xf32, #tpu.memory_space<vmem>>, vector<1x8x128xf32>
    %97 = vector.shape_cast %96 : vector<1x8x128xf32> to vector<8x128xf32>
    %98 = vector.shape_cast %89 : vector<8x128xf32> to vector<1x8x128xf32>
    tpu.vector_store %arg12[%c1, %c0_38, %c0_39], %98 {strides = array<i32>} : memref<2x8x128xf32, #tpu.memory_space<vmem>>, vector<1x8x128xf32>,
    %c1_40 = arith.constant 1 : index
    %c0_41 = arith.constant 0 : index
    %c0_42 = arith.constant 0 : index
    %99 = vector.load %arg13[%c1_40, %c0_41, %c0_42] : memref<2x8x128xf32, #tpu.memory_space<vmem>>, vector<1x8x128xf32>
    %100 = vector.shape_cast %99 : vector<1x8x128xf32> to vector<8x128xf32>
    %101 = vector.shape_cast %87 : vector<8x128xf32> to vector<1x8x128xf32>
    tpu.vector_store %arg13[%c1_40, %c0_41, %c0_42], %101 {strides = array<i32>} : memref<2x8x128xf32, #tpu.memory_space<vmem>>, vector<1x8x128xf32>,
    %102 = arith.truncf %89 : vector<8x128xf32> to vector<8x128xbf16>
    %c0_43 = arith.constant 0 : index
    %c0_44 = arith.constant 0 : index
    %103 = vector.load %arg9[%c0_43, %c0_44] : memref<128x6xbf16, #tpu.memory_space<vmem>>, vector<128x6xbf16>
    %cst_45 = arith.constant dense<0.000000e+00> : vector<8x6xf32>
    %104 = tpu.matmul %102, %103, %cst_45 {dimension_numbers = #tpu.dot_dimension_numbers<[1], [0], [0], [1], [0, 0, 1, 1], [], []>} : vector<8x128xbf16>, vector<128x6xbf16>, vector<8x6xf32> -> vector<8x6xf32>
    %c0_46 = arith.constant 0 : index
    %c0_47 = arith.constant 0 : index
    %105 = vector.load %arg10[%c0_46, %c0_47] : memref<1x6xf32, #tpu.memory_space<vmem>>, vector<1x6xf32>
    %106 = vector.broadcast %105 : vector<1x6xf32> to vector<8x6xf32>
    %107 = arith.addf %104, %106 : vector<8x6xf32>
    %c0_48 = arith.constant 0 : index
    %c0_49 = arith.constant 0 : index
    %108 = vector.load %arg11[%c0_48, %c0_49] : memref<8x6xf32, #tpu.memory_space<vmem>>, vector<8x6xf32>
    tpu.vector_store %arg11[%c0_48, %c0_49], %107 {strides = array<i32>} : memref<8x6xf32, #tpu.memory_space<vmem>>, vector<8x6xf32>,
    return
  }
}

</mosaic_0001>

<llo_original>
// kernel: decoder_forward.1
$region0: #{decoder_forward.1}
  #allocation0 [shape = 'u32[]', space=smem, size = 0x4, offset = 0x4, fixed_abs, tag = 'smem constant byte address 0x4 - core index']
  #allocation1 [shape = 'u32[144,128]{1,0:T(1,128)}', space=vmem, size = 0x12000, scoped, tag = 'internal scratch']
  %s0 = inlined_call_operand.vmem [shape: f32[8,6], index: 0, kind: input, shape index: {}]
  %s1 = inlined_call_operand.hbm [shape: f32[2,8,128], index: 1, kind: input, shape index: {}, may-alias: {1,12}]
  %s2 = inlined_call_operand.hbm [shape: f32[2,8,128], index: 2, kind: input, shape index: {}, may-alias: {2,13}]
  %s3 = inlined_call_operand.hbm [shape: bf16[6,64], index: 3, kind: input, shape index: {}]
  %s4 = inlined_call_operand.vmem [shape: f32[1,64], index: 4, kind: input, shape index: {}]
  %s5 = inlined_call_operand.vmem [shape: bf16[64,512], index: 5, kind: input, shape index: {}]
  %s6 = inlined_call_operand.hbm [shape: bf16[1,128,512], index: 6, kind: input, shape index: {}]
  %s7 = inlined_call_operand.hbm [shape: bf16[2,128,512], index: 7, kind: input, shape index: {}]
  %s8 = inlined_call_operand.hbm [shape: f32[2,1,512], index: 8, kind: input, shape index: {}]
  %s9 = inlined_call_operand.vmem [shape: bf16[128,6], index: 9, kind: input, shape index: {}]
  %s10 = inlined_call_operand.hbm [shape: f32[1,6], index: 10, kind: input, shape index: {}]
  %s11 = inlined_call_operand.hbm [shape: f32[8,6], index: 11, kind: output, shape index: {0}]
  %s12 = inlined_call_operand.hbm [shape: f32[2,8,128], index: 12, kind: output, shape index: {1}, may-alias: {1,12}]
  %s13 = inlined_call_operand.hbm [shape: f32[2,8,128], index: 13, kind: output, shape index: {2}, may-alias: {2,13}]
  %14 = xla_tuple %s11, %s12, %s13
  %s15 = sld [smem:[#allocation0]]
  $region98: #{decoder_forward.1} parent=0
    _
  %s17 = ssub.s32 1, %s15
  %s18 = scalar_select 0, %s17, %s15
  $region1: #{decoder_forward.1} parent=0
    #allocation2 [shape = 'u8[8192]{0}', space=vmem, size = 0x2000, scoped, tag = 'input window, operand 1, single buffered']
    #allocation3 [shape = 's32[1]{0}', space=sflag, size = 0x4, scoped, tag = 'scoped memory for decoder_forward.1']
    #allocation4 [shape = 's32[1]{0}', space=sflag, size = 0x4, scoped, tag = 'scoped memory for decoder_forward.1']
    #allocation5 [shape = 'u8[8192]{0}', space=vmem, size = 0x2000, scoped, tag = 'input window, operand 2, single buffered']
    #allocation6 [shape = 's32[1]{0}', space=sflag, size = 0x4, scoped, tag = 'scoped memory for decoder_forward.1']
    #allocation7 [shape = 'u8[2048]{0}', space=vmem, size = 0x800, scoped, tag = 'input window, operand 3, single buffered']
    #allocation8 [shape = 'u8[131072]{0}', space=vmem, size = 0x20000, scoped, tag = 'input window, operand 6, single buffered']
    #allocation9 [shape = 's32[1]{0}', space=sflag, size = 0x4, scoped, tag = 'scoped memory for decoder_forward.1']
    #allocation10 [shape = 'u8[262144]{0}', space=vmem, size = 0x40000, scoped, tag = 'input window, operand 7, single buffered']
    #allocation11 [shape = 'u8[4096]{0}', space=vmem, size = 0x1000, scoped, tag = 'input window, operand 8, single buffered']
    #allocation12 [shape = 's32[1]{0}', space=sflag, size = 0x4, scoped, tag = 'scoped memory for decoder_forward.1']
    #allocation13 [shape = 'u8[512]{0}', space=vmem, size = 0x400, scoped, tag = 'input window, operand 10, single buffered']
    #allocation14 [shape = 'u8[4096]{0}', space=vmem, size = 0x1000, scoped, tag = 'output window, operand 0, single buffered']
    #allocation15 [shape = 'u8[8192]{0}', space=vmem, size = 0x2000, scoped, tag = 'output window, operand 1, single buffered']
    #allocation16 [shape = 's32[1]{0}', space=sflag, size = 0x4, scoped, tag = 'scoped memory for decoder_forward.1']
    #allocation17 [shape = 'u8[8192]{0}', space=vmem, size = 0x2000, scoped, tag = 'output window, operand 2, single buffered']
    %19 = vsyncpa [#allocation3], 0
    %20 = vsyncpa [#allocation6], 0
    %21 = vsyncpa [#allocation9], 0
    %22 = vsyncpa [#allocation12], 0
    %23 = vsyncpa [#allocation4], 0
    %24 = vsyncpa [#allocation16], 0
    // Predicated region
    $region2: #{decoder_forward.1} parent=1 // pred_check
      _
    $region3: #{decoder_forward.1} parent=1 // pred_check_branch
      %26 = sbr.rel (0) target = $region5
    $region4: #{decoder_forward.1} parent=1 // pred_region
      _
    $region5: #{decoder_forward.1} parent=1 // pred_fallthru
      _
    // Predicated region
    $region6: #{decoder_forward.1} parent=1 // pred_check
      _
    $region7: #{decoder_forward.1} parent=1 // pred_check_branch
      %28 = sbr.rel (0) target = $region9
    $region8: #{decoder_forward.1} parent=1 // pred_region
      %s30 = ssub.s32 256, 256
      %31 = vsyncadd [#allocation3], %s30
      %s32 = sshll.u32 [#allocation2], 4
      %s33 = int_to_ptr.vmem [resolvable:$true] %s32
      %38 = dma.hbm_to_vmem [thread:$0]  %s1, 256, %s33, [#allocation3], 128, 128, 8
    $region9: #{decoder_forward.1} parent=1 // pred_fallthru
      _
    // Predicated region
    $region10: #{decoder_forward.1} parent=1 // pred_check
      _
    $region11: #{decoder_forward.1} parent=1 // pred_check_branch
      %40 = sbr.rel (0) target = $region13
    $region12: #{decoder_forward.1} parent=1 // pred_region
      %s42 = ssub.s32 256, 256
      %43 = vsyncadd [#allocation6], %s42
      %s44 = sshll.u32 [#allocation5], 4
      %s45 = int_to_ptr.vmem [resolvable:$true] %s44
      %50 = dma.hbm_to_vmem [thread:$0]  %s2, 256, %s45, [#allocation6], 128, 128, 8
    $region13: #{decoder_forward.1} parent=1 // pred_fallthru
      _
    // Predicated region
    $region14: #{decoder_forward.1} parent=1 // pred_check
      _
    $region15: #{decoder_forward.1} parent=1 // pred_check_branch
      %52 = sbr.rel (0) target = $region17
    $region16: #{decoder_forward.1} parent=1 // pred_region
      %s54 = ssub.s32 64, 64
      %55 = vsyncadd [#allocation6], %s54
      %s57 = sshll.u32 [#allocation7], 4
      %s58 = int_to_ptr.vmem [resolvable:$true] %s57
      %60 = dma.hbm_to_vmem [thread:$0]  %s3, 64, %s58, [#allocation6]
    $region17: #{decoder_forward.1} parent=1 // pred_fallthru
      _
    // Predicated region
    $region18: #{decoder_forward.1} parent=1 // pred_check
      _
    $region19: #{decoder_forward.1} parent=1 // pred_check_branch
      %62 = sbr.rel (0) target = $region21
    $region20: #{decoder_forward.1} parent=1 // pred_region
      _
    $region21: #{decoder_forward.1} parent=1 // pred_fallthru
      _
    // Predicated region
    $region22: #{decoder_forward.1} parent=1 // pred_check
      _
    $region23: #{decoder_forward.1} parent=1 // pred_check_branch
      %64 = sbr.rel (0) target = $region25
    $region24: #{decoder_forward.1} parent=1 // pred_region
      _
    $region25: #{decoder_forward.1} parent=1 // pred_fallthru
      _
    // Predicated region
    $region26: #{decoder_forward.1} parent=1 // pred_check
      _
    $region27: #{decoder_forward.1} parent=1 // pred_check_branch
      %66 = sbr.rel (0) target = $region29
    $region28: #{decoder_forward.1} parent=1 // pred_region
      %s68 = ssub.s32 4096, 4096
      %69 = vsyncadd [#allocation9], %s68
      %s70 = sshll.u32 [#allocation8], 4
      %s71 = int_to_ptr.vmem [resolvable:$true] %s70
      %76 = dma.hbm_to_vmem [thread:$0]  %s6, 4096, %s71, [#allocation9], 256, 256, 16
    $region29: #{decoder_forward.1} parent=1 // pred_fallthru
      _
    // Predicated region
    $region30: #{decoder_forward.1} parent=1 // pred_check
      _
    $region31: #{decoder_forward.1} parent=1 // pred_check_branch
      %78 = sbr.rel (0) target = $region33
    $region32: #{decoder_forward.1} parent=1 // pred_region
      %s80 = ssub.s32 8192, 8192
      %81 = vsyncadd [#allocation9], %s80
      %s82 = sshll.u32 [#allocation10], 4
      %s83 = int_to_ptr.vmem [resolvable:$true] %s82
      %88 = dma.hbm_to_vmem [thread:$0]  %s7, 8192, %s83, [#allocation9], 256, 256, 16
    $region33: #{decoder_forward.1} parent=1 // pred_fallthru
      _
    // Predicated region
    $region34: #{decoder_forward.1} parent=1 // pred_check
      _
    $region35: #{decoder_forward.1} parent=1 // pred_check_branch
      %90 = sbr.rel (0) target = $region37
    $region36: #{decoder_forward.1} parent=1 // pred_region
      %s92 = ssub.s32 128, 128
      %93 = vsyncadd [#allocation12], %s92
      %s94 = sshll.u32 [#allocation11], 4
      %s95 = int_to_ptr.vmem [resolvable:$true] %s94
      %100 = dma.hbm_to_vmem [thread:$0]  %s8, 128, %s95, [#allocation12], 64, 64, 4
    $region37: #{decoder_forward.1} parent=1 // pred_fallthru
      _
    // Predicated region
    $region38: #{decoder_forward.1} parent=1 // pred_check
      _
    $region39: #{decoder_forward.1} parent=1 // pred_check_branch
      %102 = sbr.rel (0) target = $region41
    $region40: #{decoder_forward.1} parent=1 // pred_region
      _
    $region41: #{decoder_forward.1} parent=1 // pred_fallthru
      _
    // Predicated region
    $region42: #{decoder_forward.1} parent=1 // pred_check
      _
    $region43: #{decoder_forward.1} parent=1 // pred_check_branch
      %104 = sbr.rel (0) target = $region45
    $region44: #{decoder_forward.1} parent=1 // pred_region
      %s106 = ssub.s32 16, 16
      %107 = vsyncadd [#allocation12], %s106
      %s109 = sshll.u32 [#allocation13], 4
      %s110 = int_to_ptr.vmem [resolvable:$true] %s109
      %112 = dma.hbm_to_vmem [thread:$0]  %s10, 16, %s110, [#allocation12]
    $region45: #{decoder_forward.1} parent=1 // pred_fallthru
      _
    // Predicated region
    $region46: #{decoder_forward.1} parent=1 // pred_check
      _
    $region47: #{decoder_forward.1} parent=1 // pred_check_branch
      %114 = sbr.rel (0) target = $region49
    $region48: #{decoder_forward.1} parent=1 // pred_region
      %115 = dma.done [#allocation3], 256
    $region49: #{decoder_forward.1} parent=1 // pred_fallthru
      _
    // Predicated region
    $region50: #{decoder_forward.1} parent=1 // pred_check
      _
    $region51: #{decoder_forward.1} parent=1 // pred_check_branch
      %117 = sbr.rel (0) target = $region53
    $region52: #{decoder_forward.1} parent=1 // pred_region
      %118 = dma.done [#allocation6], 256
    $region53: #{decoder_forward.1} parent=1 // pred_fallthru
      _
    // Predicated region
    $region54: #{decoder_forward.1} parent=1 // pred_check
      _
    $region55: #{decoder_forward.1} parent=1 // pred_check_branch
      %120 = sbr.rel (0) target = $region57
    $region56: #{decoder_forward.1} parent=1 // pred_region
      %121 = dma.done [#allocation6], 64
    $region57: #{decoder_forward.1} parent=1 // pred_fallthru
      _
    // Predicated region
    $region58: #{decoder_forward.1} parent=1 // pred_check
      _
    $region59: #{decoder_forward.1} parent=1 // pred_check_branch
      %123 = sbr.rel (0) target = $region61
    $region60: #{decoder_forward.1} parent=1 // pred_region
      %124 = dma.done [#allocation9], 4096
    $region61: #{decoder_forward.1} parent=1 // pred_fallthru
      _
    // Predicated region
    $region62: #{decoder_forward.1} parent=1 // pred_check
      _
    $region63: #{decoder_forward.1} parent=1 // pred_check_branch
      %126 = sbr.rel (0) target = $region65
    $region64: #{decoder_forward.1} parent=1 // pred_region
      %127 = dma.done [#allocation9], 8192
    $region65: #{decoder_forward.1} parent=1 // pred_fallthru
      _
    // Predicated region
    $region66: #{decoder_forward.1} parent=1 // pred_check
      _
    $region67: #{decoder_forward.1} parent=1 // pred_check_branch
      %129 = sbr.rel (0) target = $region69
    $region68: #{decoder_forward.1} parent=1 // pred_region
      %130 = dma.done [#allocation12], 128
    $region69: #{decoder_forward.1} parent=1 // pred_fallthru
      _
    // Predicated region
    $region70: #{decoder_forward.1} parent=1 // pred_check
      _
    $region71: #{decoder_forward.1} parent=1 // pred_check_branch
      %132 = sbr.rel (0) target = $region73
    $region72: #{decoder_forward.1} parent=1 // pred_region
      %133 = dma.done [#allocation12], 16
    $region73: #{decoder_forward.1} parent=1 // pred_fallthru
      _
    %v135 = vld [vmem:[%s0] sm:$0xff]
    %v136 = vpack.c.bf16 %v135, %v135
    %v137 = vld [vmem:[#allocation7] sm:$0x7]
    %v138 = vld [vmem:[%s4] sm:$0x1]
    %v140 = vlaneseq
    %v141 = vshrl.u32 %v140, 7
    %v142 = vsub.s32 0, %v141
    %v143 = vrot.slane %v138, %v142
    %vm145 = vcmask 48128
    %v147 = vsel %vm145, %v136, 0
    %vm149 = vcmask 1042432
    %v151 = vsel %vm149, %v137, 0
    %153 = vmatprep.subr.bf16.mxu0 0
    %154 = vmatpush1.bf16.msra.mxu0 %v151
    %155 = vmatprep.subr.bf16.mxu0 0
    %156 = vmatpush1.bf16.msra.mxu0 0
    %157 = vmatprep.subr.bf16.mxu0 0
    %158 = vmatpush1.bf16.msra.mxu0 0
    %159 = vmatprep.subr.bf16.mxu0 0
    %160 = vmatpush1.bf16.msra.mxu0 0
    %161 = vmatprep.subr.bf16.mxu0 0
    %162 = vmatpush1.bf16.msra.mxu0 0
    %163 = vmatprep.subr.bf16.mxu0 0
    %164 = vmatpush1.bf16.msra.mxu0 0
    %165 = vmatprep.subr.bf16.mxu0 0
    %166 = vmatpush1.bf16.msra.mxu0 0
    %167 = vmatprep.subr.bf16.mxu0 0
    %168 = vmatpush1.bf16.msra.mxu0 0
    %169 = vmatprep.subr.bf16.mxu0 0
    %170 = vmatpush1.bf16.msra.mxu0 0
    %171 = vmatprep.subr.bf16.mxu0 0
    %172 = vmatpush1.bf16.msra.mxu0 0
    %173 = vmatprep.subr.bf16.mxu0 0
    %174 = vmatpush1.bf16.msra.mxu0 0
    %175 = vmatprep.subr.bf16.mxu0 0
    %176 = vmatpush1.bf16.msra.mxu0 0
    %177 = vmatprep.subr.bf16.mxu0 0
    %178 = vmatpush1.bf16.msra.mxu0 0
    %179 = vmatprep.subr.bf16.mxu0 0
    %180 = vmatpush1.bf16.msra.mxu0 0
    %181 = vmatprep.subr.bf16.mxu0 0
    %182 = vmatpush1.bf16.msra.mxu0 0
    %183 = vmatprep.subr.bf16.mxu0 0
    %184 = vmatpush1.bf16.msra.mxu0 0
    %185 = vmatprep.mubr.bf16.mxu0 0
    %186 = vmatmul.mubr.bf16.gmra.mrb[0].mxu0 %v147
    %v187 = vpop.f32.mrb[0].mxu0
    %v188 = vadd.f32 %v143, %v187
    %v189 = vpop.f32.mrb[0].mxu0
    %v190 = vpop.f32.mrb[0].mxu0
    %v191 = vpop.f32.mrb[0].mxu0
    %192 = vdwg.mxu0
    %v193 = vmax.f32 %v188, 0.0
    %v194 = vld [vmem:[#allocation2] sm:$0xff]
    %v195 = vld [vmem:[#allocation2 + $0x8] sm:$0xff]
    %v196 = vld [vmem:[#allocation5] sm:$0xff]
    %v197 = vld [vmem:[#allocation5 + $0x8] sm:$0xff]
    %v198 = vpack.c.bf16 %v194, %v194
    %v199 = vpack.c.bf16 %v195, %v195
    %v200 = vld [vmem:[#allocation10] sm:$0xff]
    %v201 = vld [vmem:[#allocation10 + $0x8] sm:$0xff]
    %v202 = vld [vmem:[#allocation10 + $0x10] sm:$0xff]
    %v203 = vld [vmem:[#allocation10 + $0x18] sm:$0xff]
    %v204 = vld [vmem:[#allocation10 + $0x20] sm:$0xff]
    %v205 = vld [vmem:[#allocation10 + $0x28] sm:$0xff]
    %v206 = vld [vmem:[#allocation10 + $0x30] sm:$0xff]
    %v207 = vld [vmem:[#allocation10 + $0x38] sm:$0xff]
    %v208 = vld [vmem:[#allocation10 + $0x40] sm:$0xff]
    %v209 = vld [vmem:[#allocation10 + $0x48] sm:$0xff]
    %v210 = vld [vmem:[#allocation10 + $0x50] sm:$0xff]
    %v211 = vld [vmem:[#allocation10 + $0x58] sm:$0xff]
    %v212 = vld [vmem:[#allocation10 + $0x60] sm:$0xff]
    %v213 = vld [vmem:[#allocation10 + $0x68] sm:$0xff]
    %v214 = vld [vmem:[#allocation10 + $0x70] sm:$0xff]
    %v215 = vld [vmem:[#allocation10 + $0x78] sm:$0xff]
    %v216 = vld [vmem:[#allocation10 + $0x80] sm:$0xff]
    %v217 = vld [vmem:[#allocation10 + $0x88] sm:$0xff]
    %v218 = vld [vmem:[#allocation10 + $0x90] sm:$0xff]
    %v219 = vld [vmem:[#allocation10 + $0x98] sm:$0xff]
    %v220 = vld [vmem:[#allocation10 + $0xa0] sm:$0xff]
    %v221 = vld [vmem:[#allocation10 + $0xa8] sm:$0xff]
    %v222 = vld [vmem:[#allocation10 + $0xb0] sm:$0xff]
    %v223 = vld [vmem:[#allocation10 + $0xb8] sm:$0xff]
    %v224 = vld [vmem:[#allocation10 + $0xc0] sm:$0xff]
    %v225 = vld [vmem:[#allocation10 + $0xc8] sm:$0xff]
    %v226 = vld [vmem:[#allocation10 + $0xd0] sm:$0xff]
    %v227 = vld [vmem:[#allocation10 + $0xd8] sm:$0xff]
    %v228 = vld [vmem:[#allocation10 + $0xe0] sm:$0xff]
    %v229 = vld [vmem:[#allocation10 + $0xe8] sm:$0xff]
    %v230 = vld [vmem:[#allocation10 + $0xf0] sm:$0xff]
    %v231 = vld [vmem:[#allocation10 + $0xf8] sm:$0xff]
    %v232 = vld [vmem:[#allocation10 + $0x100] sm:$0xff]
    %v233 = vld [vmem:[#allocation10 + $0x108] sm:$0xff]
    %v234 = vld [vmem:[#allocation10 + $0x110] sm:$0xff]
    %v235 = vld [vmem:[#allocation10 + $0x118] sm:$0xff]
    %v236 = vld [vmem:[#allocation10 + $0x120] sm:$0xff]
    %v237 = vld [vmem:[#allocation10 + $0x128] sm:$0xff]
    %v238 = vld [vmem:[#allocation10 + $0x130] sm:$0xff]
    %v239 = vld [vmem:[#allocation10 + $0x138] sm:$0xff]
    %v240 = vld [vmem:[#allocation10 + $0x140] sm:$0xff]
    %v241 = vld [vmem:[#allocation10 + $0x148] sm:$0xff]
    %v242 = vld [vmem:[#allocation10 + $0x150] sm:$0xff]
    %v243 = vld [vmem:[#allocation10 + $0x158] sm:$0xff]
    %v244 = vld [vmem:[#allocation10 + $0x160] sm:$0xff]
    %v245 = vld [vmem:[#allocation10 + $0x168] sm:$0xff]
    %v246 = vld [vmem:[#allocation10 + $0x170] sm:$0xff]
    %v247 = vld [vmem:[#allocation10 + $0x178] sm:$0xff]
    %v248 = vld [vmem:[#allocation10 + $0x180] sm:$0xff]
    %v249 = vld [vmem:[#allocation10 + $0x188] sm:$0xff]
    %v250 = vld [vmem:[#allocation10 + $0x190] sm:$0xff]
    %v251 = vld [vmem:[#allocation10 + $0x198] sm:$0xff]
    %v252 = vld [vmem:[#allocation10 + $0x1a0] sm:$0xff]
    %v253 = vld [vmem:[#allocation10 + $0x1a8] sm:$0xff]
    %v254 = vld [vmem:[#allocation10 + $0x1b0] sm:$0xff]
    %v255 = vld [vmem:[#allocation10 + $0x1b8] sm:$0xff]
    %v256 = vld [vmem:[#allocation10 + $0x1c0] sm:$0xff]
    %v257 = vld [vmem:[#allocation10 + $0x1c8] sm:$0xff]
    %v258 = vld [vmem:[#allocation10 + $0x1d0] sm:$0xff]
    %v259 = vld [vmem:[#allocation10 + $0x1d8] sm:$0xff]
    %v260 = vld [vmem:[#allocation10 + $0x1e0] sm:$0xff]
    %v261 = vld [vmem:[#allocation10 + $0x1e8] sm:$0xff]
    %v262 = vld [vmem:[#allocation10 + $0x1f0] sm:$0xff]
    %v263 = vld [vmem:[#allocation10 + $0x1f8] sm:$0xff]
    %v296 = vunpack.c.l.b16 %v200
    %v297 = vunpack.c.h.b16 %v200
    %v298 = vunpack.c.l.b16 %v201
    %v299 = vunpack.c.h.b16 %v201
    %v300 = vunpack.c.l.b16 %v202
    %v301 = vunpack.c.h.b16 %v202
    %v302 = vunpack.c.l.b16 %v203
    %v303 = vunpack.c.h.b16 %v203
    %v304 = vunpack.c.l.b16 %v204
    %v305 = vunpack.c.h.b16 %v204
    %v306 = vunpack.c.l.b16 %v205
    %v307 = vunpack.c.h.b16 %v205
    %v308 = vunpack.c.l.b16 %v206
    %v309 = vunpack.c.h.b16 %v206
    %v310 = vunpack.c.l.b16 %v207
    %v311 = vunpack.c.h.b16 %v207
    %v312 = vunpack.c.l.b16 %v208
    %v313 = vunpack.c.h.b16 %v208
    %v314 = vunpack.c.l.b16 %v209
    %v315 = vunpack.c.h.b16 %v209
    %v316 = vunpack.c.l.b16 %v210
    %v317 = vunpack.c.h.b16 %v210
    %v318 = vunpack.c.l.b16 %v211
    %v319 = vunpack.c.h.b16 %v211
    %v320 = vunpack.c.l.b16 %v212
    %v321 = vunpack.c.h.b16 %v212
    %v322 = vunpack.c.l.b16 %v213
    %v323 = vunpack.c.h.b16 %v213
    %v324 = vunpack.c.l.b16 %v214
    %v325 = vunpack.c.h.b16 %v214
    %v326 = vunpack.c.l.b16 %v215
    %v327 = vunpack.c.h.b16 %v215
    %v328 = vunpack.c.l.b16 %v216
    %v329 = vunpack.c.h.b16 %v216
    %v330 = vunpack.c.l.b16 %v217
    %v331 = vunpack.c.h.b16 %v217
    %v332 = vunpack.c.l.b16 %v218
    %v333 = vunpack.c.h.b16 %v218
    %v334 = vunpack.c.l.b16 %v219
    %v335 = vunpack.c.h.b16 %v219
    %v336 = vunpack.c.l.b16 %v220
    %v337 = vunpack.c.h.b16 %v220
    %v338 = vunpack.c.l.b16 %v221
    %v339 = vunpack.c.h.b16 %v221
    %v340 = vunpack.c.l.b16 %v222
    %v341 = vunpack.c.h.b16 %v222
    %v342 = vunpack.c.l.b16 %v223
    %v343 = vunpack.c.h.b16 %v223
    %v344 = vunpack.c.l.b16 %v224
    %v345 = vunpack.c.h.b16 %v224
    %v346 = vunpack.c.l.b16 %v225
    %v347 = vunpack.c.h.b16 %v225
    %v348 = vunpack.c.l.b16 %v226
    %v349 = vunpack.c.h.b16 %v226
    %v350 = vunpack.c.l.b16 %v227
    %v351 = vunpack.c.h.b16 %v227
    %v352 = vunpack.c.l.b16 %v228
    %v353 = vunpack.c.h.b16 %v228
    %v354 = vunpack.c.l.b16 %v229
    %v355 = vunpack.c.h.b16 %v229
    %v356 = vunpack.c.l.b16 %v230
    %v357 = vunpack.c.h.b16 %v230
    %v358 = vunpack.c.l.b16 %v231
    %v359 = vunpack.c.h.b16 %v231
    %v360 = vpack.c.b16 %v300, %v296
    %v361 = vpack.c.b16 %v301, %v297
    %v362 = vpack.c.b16 %v302, %v298
    %v363 = vpack.c.b16 %v303, %v299
    %v364 = vpack.c.b16 %v308, %v304
    %v365 = vpack.c.b16 %v309, %v305
    %v366 = vpack.c.b16 %v310, %v306
    %v367 = vpack.c.b16 %v311, %v307
    %v368 = vpack.c.b16 %v316, %v312
    %v369 = vpack.c.b16 %v317, %v313
    %v370 = vpack.c.b16 %v318, %v314
    %v371 = vpack.c.b16 %v319, %v315
    %v372 = vpack.c.b16 %v324, %v320
    %v373 = vpack.c.b16 %v325, %v321
    %v374 = vpack.c.b16 %v326, %v322
    %v375 = vpack.c.b16 %v327, %v323
    %v376 = vpack.c.b16 %v332, %v328
    %v377 = vpack.c.b16 %v333, %v329
    %v378 = vpack.c.b16 %v334, %v330
    %v379 = vpack.c.b16 %v335, %v331
    %v380 = vpack.c.b16 %v340, %v336
    %v381 = vpack.c.b16 %v341, %v337
    %v382 = vpack.c.b16 %v342, %v338
    %v383 = vpack.c.b16 %v343, %v339
    %v384 = vpack.c.b16 %v348, %v344
    %v385 = vpack.c.b16 %v349, %v345
    %v386 = vpack.c.b16 %v350, %v346
    %v387 = vpack.c.b16 %v351, %v347
    %v388 = vpack.c.b16 %v356, %v352
    %v389 = vpack.c.b16 %v357, %v353
    %v390 = vpack.c.b16 %v358, %v354
    %v391 = vpack.c.b16 %v359, %v355
    %424 = vmatprep.subr.bf16.mxu0 %v361
    %425 = vmatpush1.bf16.msra.mxu0 %v360
    %426 = vmatprep.subr.bf16.mxu0 %v365
    %427 = vmatpush1.bf16.msra.mxu0 %v364
    %428 = vmatprep.subr.bf16.mxu0 %v369
    %429 = vmatpush1.bf16.msra.mxu0 %v368
    %430 = vmatprep.subr.bf16.mxu0 %v373
    %431 = vmatpush1.bf16.msra.mxu0 %v372
    %432 = vmatprep.subr.bf16.mxu0 %v377
    %433 = vmatpush1.bf16.msra.mxu0 %v376
    %434 = vmatprep.subr.bf16.mxu0 %v381
    %435 = vmatpush1.bf16.msra.mxu0 %v380
    %436 = vmatprep.subr.bf16.mxu0 %v385
    %437 = vmatpush1.bf16.msra.mxu0 %v384
    %438 = vmatprep.subr.bf16.mxu0 %v389
    %439 = vmatpush1.bf16.msra.mxu0 %v388
    %440 = vmatprep.subr.bf16.mxu0 0
    %441 = vmatpush1.bf16.msra.mxu0 0
    %442 = vmatprep.subr.bf16.mxu0 0
    %443 = vmatpush1.bf16.msra.mxu0 0
    %444 = vmatprep.subr.bf16.mxu0 0
    %445 = vmatpush1.bf16.msra.mxu0 0
    %446 = vmatprep.subr.bf16.mxu0 0
    %447 = vmatpush1.bf16.msra.mxu0 0
    %448 = vmatprep.subr.bf16.mxu0 0
    %449 = vmatpush1.bf16.msra.mxu0 0
    %450 = vmatprep.subr.bf16.mxu0 0
    %451 = vmatpush1.bf16.msra.mxu0 0
    %452 = vmatprep.subr.bf16.mxu0 0
    %453 = vmatpush1.bf16.msra.mxu0 0
    %454 = vmatprep.subr.bf16.mxu0 0
    %455 = vmatpush1.bf16.msra.mxu0 0
    %456 = vmatprep.mubr.bf16.mxu0 0
    %457 = vmatmul.mubr.bf16.gmra.mrb[0].mxu0 %v198
    %v458 = vpop.f32.mrb[0].mxu0
    %v459 = vadd.f32 0.0, %v458
    %v460 = vpop.f32.mrb[0].mxu0
    %v461 = vadd.f32 0.0, %v460
    %v462 = vpop.f32.mrb[0].mxu0
    %v463 = vpop.f32.mrb[0].mxu0
    %464 = vdwg.mxu0
    %465 = vmatprep.subr.bf16.mxu0 %v363
    %466 = vmatpush1.bf16.msra.mxu0 %v362
    %467 = vmatprep.subr.bf16.mxu0 %v367
    %468 = vmatpush1.bf16.msra.mxu0 %v366
    %469 = vmatprep.subr.bf16.mxu0 %v371
    %470 = vmatpush1.bf16.msra.mxu0 %v370
    %471 = vmatprep.subr.bf16.mxu0 %v375
    %472 = vmatpush1.bf16.msra.mxu0 %v374
    %473 = vmatprep.subr.bf16.mxu0 %v379
    %474 = vmatpush1.bf16.msra.mxu0 %v378
    %475 = vmatprep.subr.bf16.mxu0 %v383
    %476 = vmatpush1.bf16.msra.mxu0 %v382
    %477 = vmatprep.subr.bf16.mxu0 %v387
    %478 = vmatpush1.bf16.msra.mxu0 %v386
    %479 = vmatprep.subr.bf16.mxu0 %v391
    %480 = vmatpush1.bf16.msra.mxu0 %v390
    %481 = vmatprep.subr.bf16.mxu0 0
    %482 = vmatpush1.bf16.msra.mxu0 0
    %483 = vmatprep.subr.bf16.mxu0 0
    %484 = vmatpush1.bf16.msra.mxu0 0
    %485 = vmatprep.subr.bf16.mxu0 0
    %486 = vmatpush1.bf16.msra.mxu0 0
    %487 = vmatprep.subr.bf16.mxu0 0
    %488 = vmatpush1.bf16.msra.mxu0 0
    %489 = vmatprep.subr.bf16.mxu0 0
    %490 = vmatpush1.bf16.msra.mxu0 0
    %491 = vmatprep.subr.bf16.mxu0 0
    %492 = vmatpush1.bf16.msra.mxu0 0
    %493 = vmatprep.subr.bf16.mxu0 0
    %494 = vmatpush1.bf16.msra.mxu0 0
    %495 = vmatprep.subr.bf16.mxu0 0
    %496 = vmatpush1.bf16.msra.mxu0 0
    %497 = vmatprep.mubr.bf16.mxu0 0
    %498 = vmatmul.mubr.bf16.gmra.mrb[0].mxu0 %v198
    %v499 = vpop.f32.mrb[0].mxu0
    %v500 = vadd.f32 0.0, %v499
    %v501 = vpop.f32.mrb[0].mxu0
    %v502 = vadd.f32 0.0, %v501
    %v503 = vpop.f32.mrb[0].mxu0
    %v504 = vpop.f32.mrb[0].mxu0
    %505 = vdwg.mxu0
    %v538 = vunpack.c.l.b16 %v232
    %v539 = vunpack.c.h.b16 %v232
    %v540 = vunpack.c.l.b16 %v233
    %v541 = vunpack.c.h.b16 %v233
    %v542 = vunpack.c.l.b16 %v234
    %v543 = vunpack.c.h.b16 %v234
    %v544 = vunpack.c.l.b16 %v235
    %v545 = vunpack.c.h.b16 %v235
    %v546 = vunpack.c.l.b16 %v236
    %v547 = vunpack.c.h.b16 %v236
    %v548 = vunpack.c.l.b16 %v237
    %v549 = vunpack.c.h.b16 %v237
    %v550 = vunpack.c.l.b16 %v238
    %v551 = vunpack.c.h.b16 %v238
    %v552 = vunpack.c.l.b16 %v239
    %v553 = vunpack.c.h.b16 %v239
    %v554 = vunpack.c.l.b16 %v240
    %v555 = vunpack.c.h.b16 %v240
    %v556 = vunpack.c.l.b16 %v241
    %v557 = vunpack.c.h.b16 %v241
    %v558 = vunpack.c.l.b16 %v242
    %v559 = vunpack.c.h.b16 %v242
    %v560 = vunpack.c.l.b16 %v243
    %v561 = vunpack.c.h.b16 %v243
    %v562 = vunpack.c.l.b16 %v244
    %v563 = vunpack.c.h.b16 %v244
    %v564 = vunpack.c.l.b16 %v245
    %v565 = vunpack.c.h.b16 %v245
    %v566 = vunpack.c.l.b16 %v246
    %v567 = vunpack.c.h.b16 %v246
    %v568 = vunpack.c.l.b16 %v247
    %v569 = vunpack.c.h.b16 %v247
    %v570 = vunpack.c.l.b16 %v248
    %v571 = vunpack.c.h.b16 %v248
    %v572 = vunpack.c.l.b16 %v249
    %v573 = vunpack.c.h.b16 %v249
    %v574 = vunpack.c.l.b16 %v250
    %v575 = vunpack.c.h.b16 %v250
    %v576 = vunpack.c.l.b16 %v251
    %v577 = vunpack.c.h.b16 %v251
    %v578 = vunpack.c.l.b16 %v252
    %v579 = vunpack.c.h.b16 %v252
    %v580 = vunpack.c.l.b16 %v253
    %v581 = vunpack.c.h.b16 %v253
    %v582 = vunpack.c.l.b16 %v254
    %v583 = vunpack.c.h.b16 %v254
    %v584 = vunpack.c.l.b16 %v255
    %v585 = vunpack.c.h.b16 %v255
    %v586 = vunpack.c.l.b16 %v256
    %v587 = vunpack.c.h.b16 %v256
    %v588 = vunpack.c.l.b16 %v257
    %v589 = vunpack.c.h.b16 %v257
    %v590 = vunpack.c.l.b16 %v258
    %v591 = vunpack.c.h.b16 %v258
    %v592 = vunpack.c.l.b16 %v259
    %v593 = vunpack.c.h.b16 %v259
    %v594 = vunpack.c.l.b16 %v260
    %v595 = vunpack.c.h.b16 %v260
    %v596 = vunpack.c.l.b16 %v261
    %v597 = vunpack.c.h.b16 %v261
    %v598 = vunpack.c.l.b16 %v262
    %v599 = vunpack.c.h.b16 %v262
    %v600 = vunpack.c.l.b16 %v263
    %v601 = vunpack.c.h.b16 %v263
    %v602 = vpack.c.b16 %v542, %v538
    %v603 = vpack.c.b16 %v543, %v539
    %v604 = vpack.c.b16 %v544, %v540
    %v605 = vpack.c.b16 %v545, %v541
    %v606 = vpack.c.b16 %v550, %v546
    %v607 = vpack.c.b16 %v551, %v547
    %v608 = vpack.c.b16 %v552, %v548
    %v609 = vpack.c.b16 %v553, %v549
    %v610 = vpack.c.b16 %v558, %v554
    %v611 = vpack.c.b16 %v559, %v555
    %v612 = vpack.c.b16 %v560, %v556
    %v613 = vpack.c.b16 %v561, %v557
    %v614 = vpack.c.b16 %v566, %v562
    %v615 = vpack.c.b16 %v567, %v563
    %v616 = vpack.c.b16 %v568, %v564
    %v617 = vpack.c.b16 %v569, %v565
    %v618 = vpack.c.b16 %v574, %v570
    %v619 = vpack.c.b16 %v575, %v571
    %v620 = vpack.c.b16 %v576, %v572
    %v621 = vpack.c.b16 %v577, %v573
    %v622 = vpack.c.b16 %v582, %v578
    %v623 = vpack.c.b16 %v583, %v579
    %v624 = vpack.c.b16 %v584, %v580
    %v625 = vpack.c.b16 %v585, %v581
    %v626 = vpack.c.b16 %v590, %v586
    %v627 = vpack.c.b16 %v591, %v587
    %v628 = vpack.c.b16 %v592, %v588
    %v629 = vpack.c.b16 %v593, %v589
    %v630 = vpack.c.b16 %v598, %v594
    %v631 = vpack.c.b16 %v599, %v595
    %v632 = vpack.c.b16 %v600, %v596
    %v633 = vpack.c.b16 %v601, %v597
    %666 = vmatprep.subr.bf16.mxu0 %v603
    %667 = vmatpush1.bf16.msra.mxu0 %v602
    %668 = vmatprep.subr.bf16.mxu0 %v607
    %669 = vmatpush1.bf16.msra.mxu0 %v606
    %670 = vmatprep.subr.bf16.mxu0 %v611
    %671 = vmatpush1.bf16.msra.mxu0 %v610
    %672 = vmatprep.subr.bf16.mxu0 %v615
    %673 = vmatpush1.bf16.msra.mxu0 %v614
    %674 = vmatprep.subr.bf16.mxu0 %v619
    %675 = vmatpush1.bf16.msra.mxu0 %v618
    %676 = vmatprep.subr.bf16.mxu0 %v623
    %677 = vmatpush1.bf16.msra.mxu0 %v622
    %678 = vmatprep.subr.bf16.mxu0 %v627
    %679 = vmatpush1.bf16.msra.mxu0 %v626
    %680 = vmatprep.subr.bf16.mxu0 %v631
    %681 = vmatpush1.bf16.msra.mxu0 %v630
    %682 = vmatprep.subr.bf16.mxu0 0
    %683 = vmatpush1.bf16.msra.mxu0 0
    %684 = vmatprep.subr.bf16.mxu0 0
    %685 = vmatpush1.bf16.msra.mxu0 0
    %686 = vmatprep.subr.bf16.mxu0 0
    %687 = vmatpush1.bf16.msra.mxu0 0
    %688 = vmatprep.subr.bf16.mxu0 0
    %689 = vmatpush1.bf16.msra.mxu0 0
    %690 = vmatprep.subr.bf16.mxu0 0
    %691 = vmatpush1.bf16.msra.mxu0 0
    %692 = vmatprep.subr.bf16.mxu0 0
    %693 = vmatpush1.bf16.msra.mxu0 0
    %694 = vmatprep.subr.bf16.mxu0 0
    %695 = vmatpush1.bf16.msra.mxu0 0
    %696 = vmatprep.subr.bf16.mxu0 0
    %697 = vmatpush1.bf16.msra.mxu0 0
    %698 = vmatprep.mubr.bf16.mxu0 0
    %699 = vmatmul.mubr.bf16.gmra.mrb[0].mxu0 %v199
    %v700 = vpop.f32.mrb[0].mxu0
    %v701 = vadd.f32 0.0, %v700
    %v702 = vpop.f32.mrb[0].mxu0
    %v703 = vadd.f32 0.0, %v702
    %v704 = vpop.f32.mrb[0].mxu0
    %v705 = vpop.f32.mrb[0].mxu0
    %706 = vdwg.mxu0
    %707 = vmatprep.subr.bf16.mxu0 %v605
    %708 = vmatpush1.bf16.msra.mxu0 %v604
    %709 = vmatprep.subr.bf16.mxu0 %v609
    %710 = vmatpush1.bf16.msra.mxu0 %v608
    %711 = vmatprep.subr.bf16.mxu0 %v613
    %712 = vmatpush1.bf16.msra.mxu0 %v612
    %713 = vmatprep.subr.bf16.mxu0 %v617
    %714 = vmatpush1.bf16.msra.mxu0 %v616
    %715 = vmatprep.subr.bf16.mxu0 %v621
    %716 = vmatpush1.bf16.msra.mxu0 %v620
    %717 = vmatprep.subr.bf16.mxu0 %v625
    %718 = vmatpush1.bf16.msra.mxu0 %v624
    %719 = vmatprep.subr.bf16.mxu0 %v629
    %720 = vmatpush1.bf16.msra.mxu0 %v628
    %721 = vmatprep.subr.bf16.mxu0 %v633
    %722 = vmatpush1.bf16.msra.mxu0 %v632
    %723 = vmatprep.subr.bf16.mxu0 0
    %724 = vmatpush1.bf16.msra.mxu0 0
    %725 = vmatprep.subr.bf16.mxu0 0
    %726 = vmatpush1.bf16.msra.mxu0 0
    %727 = vmatprep.subr.bf16.mxu0 0
    %728 = vmatpush1.bf16.msra.mxu0 0
    %729 = vmatprep.subr.bf16.mxu0 0
    %730 = vmatpush1.bf16.msra.mxu0 0
    %731 = vmatprep.subr.bf16.mxu0 0
    %732 = vmatpush1.bf16.msra.mxu0 0
    %733 = vmatprep.subr.bf16.mxu0 0
    %734 = vmatpush1.bf16.msra.mxu0 0
    %735 = vmatprep.subr.bf16.mxu0 0
    %736 = vmatpush1.bf16.msra.mxu0 0
    %737 = vmatprep.subr.bf16.mxu0 0
    %738 = vmatpush1.bf16.msra.mxu0 0
    %739 = vmatprep.mubr.bf16.mxu0 0
    %740 = vmatmul.mubr.bf16.gmra.mrb[0].mxu0 %v199
    %v741 = vpop.f32.mrb[0].mxu0
    %v742 = vadd.f32 0.0, %v741
    %v743 = vpop.f32.mrb[0].mxu0
    %v744 = vadd.f32 0.0, %v743
    %v745 = vpop.f32.mrb[0].mxu0
    %v746 = vpop.f32.mrb[0].mxu0
    %747 = vdwg.mxu0
    %v748 = vld [vmem:[#allocation11] sm:$0xf]
    %v749 = vld [vmem:[#allocation11 + $0x4] sm:$0xf]
    %v750 = vld [vmem:[%s5] sm:$0xff]
    %v751 = vld [vmem:[%s5 + $0x8] sm:$0xff]
    %v752 = vld [vmem:[%s5 + $0x10] sm:$0xff]
    %v753 = vld [vmem:[%s5 + $0x18] sm:$0xff]
    %v754 = vld [vmem:[%s5 + $0x20] sm:$0xff]
    %v755 = vld [vmem:[%s5 + $0x28] sm:$0xff]
    %v756 = vld [vmem:[%s5 + $0x30] sm:$0xff]
    %v757 = vld [vmem:[%s5 + $0x38] sm:$0xff]
    %v758 = vld [vmem:[%s5 + $0x40] sm:$0xff]
    %v759 = vld [vmem:[%s5 + $0x48] sm:$0xff]
    %v760 = vld [vmem:[%s5 + $0x50] sm:$0xff]
    %v761 = vld [vmem:[%s5 + $0x58] sm:$0xff]
    %v762 = vld [vmem:[%s5 + $0x60] sm:$0xff]
    %v763 = vld [vmem:[%s5 + $0x68] sm:$0xff]
    %v764 = vld [vmem:[%s5 + $0x70] sm:$0xff]
    %v765 = vld [vmem:[%s5 + $0x78] sm:$0xff]
    %v766 = vpack.c.bf16 %v193, %v193
    %v783 = vunpack.c.l.b16 %v750
    %v784 = vunpack.c.h.b16 %v750
    %v785 = vunpack.c.l.b16 %v751
    %v786 = vunpack.c.h.b16 %v751
    %v787 = vunpack.c.l.b16 %v752
    %v788 = vunpack.c.h.b16 %v752
    %v789 = vunpack.c.l.b16 %v753
    %v790 = vunpack.c.h.b16 %v753
    %v791 = vunpack.c.l.b16 %v754
    %v792 = vunpack.c.h.b16 %v754
    %v793 = vunpack.c.l.b16 %v755
    %v794 = vunpack.c.h.b16 %v755
    %v795 = vunpack.c.l.b16 %v756
    %v796 = vunpack.c.h.b16 %v756
    %v797 = vunpack.c.l.b16 %v757
    %v798 = vunpack.c.h.b16 %v757
    %v799 = vunpack.c.l.b16 %v758
    %v800 = vunpack.c.h.b16 %v758
    %v801 = vunpack.c.l.b16 %v759
    %v802 = vunpack.c.h.b16 %v759
    %v803 = vunpack.c.l.b16 %v760
    %v804 = vunpack.c.h.b16 %v760
    %v805 = vunpack.c.l.b16 %v761
    %v806 = vunpack.c.h.b16 %v761
    %v807 = vunpack.c.l.b16 %v762
    %v808 = vunpack.c.h.b16 %v762
    %v809 = vunpack.c.l.b16 %v763
    %v810 = vunpack.c.h.b16 %v763
    %v811 = vunpack.c.l.b16 %v764
    %v812 = vunpack.c.h.b16 %v764
    %v813 = vunpack.c.l.b16 %v765
    %v814 = vunpack.c.h.b16 %v765
    %v815 = vpack.c.b16 %v787, %v783
    %v816 = vpack.c.b16 %v788, %v784
    %v817 = vpack.c.b16 %v789, %v785
    %v818 = vpack.c.b16 %v790, %v786
    %v819 = vpack.c.b16 %v795, %v791
    %v820 = vpack.c.b16 %v796, %v792
    %v821 = vpack.c.b16 %v797, %v793
    %v822 = vpack.c.b16 %v798, %v794
    %v823 = vpack.c.b16 %v803, %v799
    %v824 = vpack.c.b16 %v804, %v800
    %v825 = vpack.c.b16 %v805, %v801
    %v826 = vpack.c.b16 %v806, %v802
    %v827 = vpack.c.b16 %v811, %v807
    %v828 = vpack.c.b16 %v812, %v808
    %v829 = vpack.c.b16 %v813, %v809
    %v830 = vpack.c.b16 %v814, %v810
    %vm847 = vcmask 523264
    %v849 = vsel %vm847, %v766, 0
    %851 = vmatprep.subr.bf16.mxu0 %v816
    %852 = vmatpush1.bf16.msra.mxu0 %v815
    %853 = vmatprep.subr.bf16.mxu0 %v820
    %854 = vmatpush1.bf16.msra.mxu0 %v819
    %855 = vmatprep.subr.bf16.mxu0 %v824
    %856 = vmatpush1.bf16.msra.mxu0 %v823
    %857 = vmatprep.subr.bf16.mxu0 %v828
    %858 = vmatpush1.bf16.msra.mxu0 %v827
    %859 = vmatprep.subr.bf16.mxu0 0
    %860 = vmatpush1.bf16.msra.mxu0 0
    %861 = vmatprep.subr.bf16.mxu0 0
    %862 = vmatpush1.bf16.msra.mxu0 0
    %863 = vmatprep.subr.bf16.mxu0 0
    %864 = vmatpush1.bf16.msra.mxu0 0
    %865 = vmatprep.subr.bf16.mxu0 0
    %866 = vmatpush1.bf16.msra.mxu0 0
    %867 = vmatprep.subr.bf16.mxu0 0
    %868 = vmatpush1.bf16.msra.mxu0 0
    %869 = vmatprep.subr.bf16.mxu0 0
    %870 = vmatpush1.bf16.msra.mxu0 0
    %871 = vmatprep.subr.bf16.mxu0 0
    %872 = vmatpush1.bf16.msra.mxu0 0
    %873 = vmatprep.subr.bf16.mxu0 0
    %874 = vmatpush1.bf16.msra.mxu0 0
    %875 = vmatprep.subr.bf16.mxu0 0
    %876 = vmatpush1.bf16.msra.mxu0 0
    %877 = vmatprep.subr.bf16.mxu0 0
    %878 = vmatpush1.bf16.msra.mxu0 0
    %879 = vmatprep.subr.bf16.mxu0 0
    %880 = vmatpush1.bf16.msra.mxu0 0
    %881 = vmatprep.subr.bf16.mxu0 0
    %882 = vmatpush1.bf16.msra.mxu0 0
    %883 = vmatprep.mubr.bf16.mxu0 0
    %884 = vmatmul.mubr.bf16.gmra.mrb[0].mxu0 %v849
    %v885 = vpop.f32.mrb[0].mxu0
    %v886 = vadd.f32 %v459, %v885
    %v887 = vpop.f32.mrb[0].mxu0
    %v888 = vadd.f32 %v461, %v887
    %v889 = vpop.f32.mrb[0].mxu0
    %v890 = vpop.f32.mrb[0].mxu0
    %891 = vdwg.mxu0
    %892 = vmatprep.subr.bf16.mxu0 %v818
    %893 = vmatpush1.bf16.msra.mxu0 %v817
    %894 = vmatprep.subr.bf16.mxu0 %v822
    %895 = vmatpush1.bf16.msra.mxu0 %v821
    %896 = vmatprep.subr.bf16.mxu0 %v826
    %897 = vmatpush1.bf16.msra.mxu0 %v825
    %898 = vmatprep.subr.bf16.mxu0 %v830
    %899 = vmatpush1.bf16.msra.mxu0 %v829
    %900 = vmatprep.subr.bf16.mxu0 0
    %901 = vmatpush1.bf16.msra.mxu0 0
    %902 = vmatprep.subr.bf16.mxu0 0
    %903 = vmatpush1.bf16.msra.mxu0 0
    %904 = vmatprep.subr.bf16.mxu0 0
    %905 = vmatpush1.bf16.msra.mxu0 0
    %906 = vmatprep.subr.bf16.mxu0 0
    %907 = vmatpush1.bf16.msra.mxu0 0
    %908 = vmatprep.subr.bf16.mxu0 0
    %909 = vmatpush1.bf16.msra.mxu0 0
    %910 = vmatprep.subr.bf16.mxu0 0
    %911 = vmatpush1.bf16.msra.mxu0 0
    %912 = vmatprep.subr.bf16.mxu0 0
    %913 = vmatpush1.bf16.msra.mxu0 0
    %914 = vmatprep.subr.bf16.mxu0 0
    %915 = vmatpush1.bf16.msra.mxu0 0
    %916 = vmatprep.subr.bf16.mxu0 0
    %917 = vmatpush1.bf16.msra.mxu0 0
    %918 = vmatprep.subr.bf16.mxu0 0
    %919 = vmatpush1.bf16.msra.mxu0 0
    %920 = vmatprep.subr.bf16.mxu0 0
    %921 = vmatpush1.bf16.msra.mxu0 0
    %922 = vmatprep.subr.bf16.mxu0 0
    %923 = vmatpush1.bf16.msra.mxu0 0
    %924 = vmatprep.mubr.bf16.mxu0 0
    %925 = vmatmul.mubr.bf16.gmra.mrb[0].mxu0 %v849
    %v926 = vpop.f32.mrb[0].mxu0
    %v927 = vadd.f32 %v500, %v926
    %v928 = vpop.f32.mrb[0].mxu0
    %v929 = vadd.f32 %v502, %v928
    %v930 = vpop.f32.mrb[0].mxu0
    %v931 = vpop.f32.mrb[0].mxu0
    %932 = vdwg.mxu0
    %v934 = vlaneseq
    %v935 = vshrl.u32 %v934, 7
    %v936 = vsub.s32 0, %v935
    %v937 = vrot.slane %v748, %v936
    %v938 = vlaneseq
    %v939 = vshrl.u32 %v938, 7
    %v940 = vsub.s32 1, %v939
    %v941 = vrot.slane %v748, %v940
    %v942 = vlaneseq
    %v943 = vshrl.u32 %v942, 7
    %v944 = vsub.s32 2, %v943
    %v945 = vrot.slane %v748, %v944
    %v946 = vlaneseq
    %v947 = vshrl.u32 %v946, 7
    %v948 = vsub.s32 3, %v947
    %v949 = vrot.slane %v748, %v948
    %v954 = vadd.f32 %v886, %v937
    %v955 = vadd.f32 %v888, %v941
    %v956 = vadd.f32 %v927, %v945
    %v957 = vadd.f32 %v929, %v949
    %v958 = vxor.u32 %v954, 2147483648
    %v959 = vmul.f32 %v958, 1.442695
    %v960 = vpow.pop %v959
    %v961 = vadd.f32 %v960, 1.0
    %v962 = vrcp.pop %v961
    %v963 = vmul.f32 1.0, %v962
    %v964 = vxor.u32 %v955, 2147483648
    %v965 = vmul.f32 %v964, 1.442695
    %v966 = vpow.pop %v965
    %v967 = vadd.f32 %v966, 1.0
    %v968 = vrcp.pop %v967
    %v969 = vmul.f32 1.0, %v968
    %v970 = vtanh.pop %v956
    %v971 = vxor.u32 %v957, 2147483648
    %v972 = vmul.f32 %v971, 1.442695
    %v973 = vpow.pop %v972
    %v974 = vadd.f32 %v973, 1.0
    %v975 = vrcp.pop %v974
    %v976 = vmul.f32 1.0, %v975
    %v977 = vmul.f32 %v969, %v196
    %v978 = vmul.f32 %v963, %v970
    %v979 = vadd.f32 %v977, %v978
    %v980 = vtanh.pop %v979
    %v981 = vmul.f32 %v976, %v980
    %v982 = vld [vmem:[#allocation8] sm:$0xff]
    %v983 = vld [vmem:[#allocation8 + $0x8] sm:$0xff]
    %v984 = vld [vmem:[#allocation8 + $0x10] sm:$0xff]
    %v985 = vld [vmem:[#allocation8 + $0x18] sm:$0xff]
    %v986 = vld [vmem:[#allocation8 + $0x20] sm:$0xff]
    %v987 = vld [vmem:[#allocation8 + $0x28] sm:$0xff]
    %v988 = vld [vmem:[#allocation8 + $0x30] sm:$0xff]
    %v989 = vld [vmem:[#allocation8 + $0x38] sm:$0xff]
    %v990 = vld [vmem:[#allocation8 + $0x40] sm:$0xff]
    %v991 = vld [vmem:[#allocation8 + $0x48] sm:$0xff]
    %v992 = vld [vmem:[#allocation8 + $0x50] sm:$0xff]
    %v993 = vld [vmem:[#allocation8 + $0x58] sm:$0xff]
    %v994 = vld [vmem:[#allocation8 + $0x60] sm:$0xff]
    %v995 = vld [vmem:[#allocation8 + $0x68] sm:$0xff]
    %v996 = vld [vmem:[#allocation8 + $0x70] sm:$0xff]
    %v997 = vld [vmem:[#allocation8 + $0x78] sm:$0xff]
    %v998 = vld [vmem:[#allocation8 + $0x80] sm:$0xff]
    %v999 = vld [vmem:[#allocation8 + $0x88] sm:$0xff]
    %v1000 = vld [vmem:[#allocation8 + $0x90] sm:$0xff]
    %v1001 = vld [vmem:[#allocation8 + $0x98] sm:$0xff]
    %v1002 = vld [vmem:[#allocation8 + $0xa0] sm:$0xff]
    %v1003 = vld [vmem:[#allocation8 + $0xa8] sm:$0xff]
    %v1004 = vld [vmem:[#allocation8 + $0xb0] sm:$0xff]
    %v1005 = vld [vmem:[#allocation8 + $0xb8] sm:$0xff]
    %v1006 = vld [vmem:[#allocation8 + $0xc0] sm:$0xff]
    %v1007 = vld [vmem:[#allocation8 + $0xc8] sm:$0xff]
    %v1008 = vld [vmem:[#allocation8 + $0xd0] sm:$0xff]
    %v1009 = vld [vmem:[#allocation8 + $0xd8] sm:$0xff]
    %v1010 = vld [vmem:[#allocation8 + $0xe0] sm:$0xff]
    %v1011 = vld [vmem:[#allocation8 + $0xe8] sm:$0xff]
    %v1012 = vld [vmem:[#allocation8 + $0xf0] sm:$0xff]
    %v1013 = vld [vmem:[#allocation8 + $0xf8] sm:$0xff]
    %v1014 = vpack.c.bf16 %v981, %v981
    %v1047 = vunpack.c.l.b16 %v982
    %v1048 = vunpack.c.h.b16 %v982
    %v1049 = vunpack.c.l.b16 %v983
    %v1050 = vunpack.c.h.b16 %v983
    %v1051 = vunpack.c.l.b16 %v984
    %v1052 = vunpack.c.h.b16 %v984
    %v1053 = vunpack.c.l.b16 %v985
    %v1054 = vunpack.c.h.b16 %v985
    %v1055 = vunpack.c.l.b16 %v986
    %v1056 = vunpack.c.h.b16 %v986
    %v1057 = vunpack.c.l.b16 %v987
    %v1058 = vunpack.c.h.b16 %v987
    %v1059 = vunpack.c.l.b16 %v988
    %v1060 = vunpack.c.h.b16 %v988
    %v1061 = vunpack.c.l.b16 %v989
    %v1062 = vunpack.c.h.b16 %v989
    %v1063 = vunpack.c.l.b16 %v990
    %v1064 = vunpack.c.h.b16 %v990
    %v1065 = vunpack.c.l.b16 %v991
    %v1066 = vunpack.c.h.b16 %v991
    %v1067 = vunpack.c.l.b16 %v992
    %v1068 = vunpack.c.h.b16 %v992
    %v1069 = vunpack.c.l.b16 %v993
    %v1070 = vunpack.c.h.b16 %v993
    %v1071 = vunpack.c.l.b16 %v994
    %v1072 = vunpack.c.h.b16 %v994
    %v1073 = vunpack.c.l.b16 %v995
    %v1074 = vunpack.c.h.b16 %v995
    %v1075 = vunpack.c.l.b16 %v996
    %v1076 = vunpack.c.h.b16 %v996
    %v1077 = vunpack.c.l.b16 %v997
    %v1078 = vunpack.c.h.b16 %v997
    %v1079 = vunpack.c.l.b16 %v998
    %v1080 = vunpack.c.h.b16 %v998
    %v1081 = vunpack.c.l.b16 %v999
    %v1082 = vunpack.c.h.b16 %v999
    %v1083 = vunpack.c.l.b16 %v1000
    %v1084 = vunpack.c.h.b16 %v1000
    %v1085 = vunpack.c.l.b16 %v1001
    %v1086 = vunpack.c.h.b16 %v1001
    %v1087 = vunpack.c.l.b16 %v1002
    %v1088 = vunpack.c.h.b16 %v1002
    %v1089 = vunpack.c.l.b16 %v1003
    %v1090 = vunpack.c.h.b16 %v1003
    %v1091 = vunpack.c.l.b16 %v1004
    %v1092 = vunpack.c.h.b16 %v1004
    %v1093 = vunpack.c.l.b16 %v1005
    %v1094 = vunpack.c.h.b16 %v1005
    %v1095 = vunpack.c.l.b16 %v1006
    %v1096 = vunpack.c.h.b16 %v1006
    %v1097 = vunpack.c.l.b16 %v1007
    %v1098 = vunpack.c.h.b16 %v1007
    %v1099 = vunpack.c.l.b16 %v1008
    %v1100 = vunpack.c.h.b16 %v1008
    %v1101 = vunpack.c.l.b16 %v1009
    %v1102 = vunpack.c.h.b16 %v1009
    %v1103 = vunpack.c.l.b16 %v1010
    %v1104 = vunpack.c.h.b16 %v1010
    %v1105 = vunpack.c.l.b16 %v1011
    %v1106 = vunpack.c.h.b16 %v1011
    %v1107 = vunpack.c.l.b16 %v1012
    %v1108 = vunpack.c.h.b16 %v1012
    %v1109 = vunpack.c.l.b16 %v1013
    %v1110 = vunpack.c.h.b16 %v1013
    %v1111 = vpack.c.b16 %v1051, %v1047
    %v1112 = vpack.c.b16 %v1052, %v1048
    %v1113 = vpack.c.b16 %v1053, %v1049
    %v1114 = vpack.c.b16 %v1054, %v1050
    %v1115 = vpack.c.b16 %v1059, %v1055
    %v1116 = vpack.c.b16 %v1060, %v1056
    %v1117 = vpack.c.b16 %v1061, %v1057
    %v1118 = vpack.c.b16 %v1062, %v1058
    %v1119 = vpack.c.b16 %v1067, %v1063
    %v1120 = vpack.c.b16 %v1068, %v1064
    %v1121 = vpack.c.b16 %v1069, %v1065
    %v1122 = vpack.c.b16 %v1070, %v1066
    %v1123 = vpack.c.b16 %v1075, %v1071
    %v1124 = vpack.c.b16 %v1076, %v1072
    %v1125 = vpack.c.b16 %v1077, %v1073
    %v1126 = vpack.c.b16 %v1078, %v1074
    %v1127 = vpack.c.b16 %v1083, %v1079
    %v1128 = vpack.c.b16 %v1084, %v1080
    %v1129 = vpack.c.b16 %v1085, %v1081
    %v1130 = vpack.c.b16 %v1086, %v1082
    %v1131 = vpack.c.b16 %v1091, %v1087
    %v1132 = vpack.c.b16 %v1092, %v1088
    %v1133 = vpack.c.b16 %v1093, %v1089
    %v1134 = vpack.c.b16 %v1094, %v1090
    %v1135 = vpack.c.b16 %v1099, %v1095
    %v1136 = vpack.c.b16 %v1100, %v1096
    %v1137 = vpack.c.b16 %v1101, %v1097
    %v1138 = vpack.c.b16 %v1102, %v1098
    %v1139 = vpack.c.b16 %v1107, %v1103
    %v1140 = vpack.c.b16 %v1108, %v1104
    %v1141 = vpack.c.b16 %v1109, %v1105
    %v1142 = vpack.c.b16 %v1110, %v1106
    %1175 = vmatprep.subr.bf16.mxu0 %v1112
    %1176 = vmatpush1.bf16.msra.mxu0 %v1111
    %1177 = vmatprep.subr.bf16.mxu0 %v1116
    %1178 = vmatpush1.bf16.msra.mxu0 %v1115
    %1179 = vmatprep.subr.bf16.mxu0 %v1120
    %1180 = vmatpush1.bf16.msra.mxu0 %v1119
    %1181 = vmatprep.subr.bf16.mxu0 %v1124
    %1182 = vmatpush1.bf16.msra.mxu0 %v1123
    %1183 = vmatprep.subr.bf16.mxu0 %v1128
    %1184 = vmatpush1.bf16.msra.mxu0 %v1127
    %1185 = vmatprep.subr.bf16.mxu0 %v1132
    %1186 = vmatpush1.bf16.msra.mxu0 %v1131
    %1187 = vmatprep.subr.bf16.mxu0 %v1136
    %1188 = vmatpush1.bf16.msra.mxu0 %v1135
    %1189 = vmatprep.subr.bf16.mxu0 %v1140
    %1190 = vmatpush1.bf16.msra.mxu0 %v1139
    %1191 = vmatprep.subr.bf16.mxu0 0
    %1192 = vmatpush1.bf16.msra.mxu0 0
    %1193 = vmatprep.subr.bf16.mxu0 0
    %1194 = vmatpush1.bf16.msra.mxu0 0
    %1195 = vmatprep.subr.bf16.mxu0 0
    %1196 = vmatpush1.bf16.msra.mxu0 0
    %1197 = vmatprep.subr.bf16.mxu0 0
    %1198 = vmatpush1.bf16.msra.mxu0 0
    %1199 = vmatprep.subr.bf16.mxu0 0
    %1200 = vmatpush1.bf16.msra.mxu0 0
    %1201 = vmatprep.subr.bf16.mxu0 0
    %1202 = vmatpush1.bf16.msra.mxu0 0
    %1203 = vmatprep.subr.bf16.mxu0 0
    %1204 = vmatpush1.bf16.msra.mxu0 0
    %1205 = vmatprep.subr.bf16.mxu0 0
    %1206 = vmatpush1.bf16.msra.mxu0 0
    %1207 = vmatprep.mubr.bf16.mxu0 0
    %1208 = vmatmul.mubr.bf16.gmra.mrb[0].mxu0 %v1014
    %v1209 = vpop.f32.mrb[0].mxu0
    %v1210 = vadd.f32 %v701, %v1209
    %v1211 = vpop.f32.mrb[0].mxu0
    %v1212 = vadd.f32 %v703, %v1211
    %v1213 = vpop.f32.mrb[0].mxu0
    %v1214 = vpop.f32.mrb[0].mxu0
    %1215 = vdwg.mxu0
    %1216 = vmatprep.subr.bf16.mxu0 %v1114
    %1217 = vmatpush1.bf16.msra.mxu0 %v1113
    %1218 = vmatprep.subr.bf16.mxu0 %v1118
    %1219 = vmatpush1.bf16.msra.mxu0 %v1117
    %1220 = vmatprep.subr.bf16.mxu0 %v1122
    %1221 = vmatpush1.bf16.msra.mxu0 %v1121
    %1222 = vmatprep.subr.bf16.mxu0 %v1126
    %1223 = vmatpush1.bf16.msra.mxu0 %v1125
    %1224 = vmatprep.subr.bf16.mxu0 %v1130
    %1225 = vmatpush1.bf16.msra.mxu0 %v1129
    %1226 = vmatprep.subr.bf16.mxu0 %v1134
    %1227 = vmatpush1.bf16.msra.mxu0 %v1133
    %1228 = vmatprep.subr.bf16.mxu0 %v1138
    %1229 = vmatpush1.bf16.msra.mxu0 %v1137
    %1230 = vmatprep.subr.bf16.mxu0 %v1142
    %1231 = vmatpush1.bf16.msra.mxu0 %v1141
    %1232 = vmatprep.subr.bf16.mxu0 0
    %1233 = vmatpush1.bf16.msra.mxu0 0
    %1234 = vmatprep.subr.bf16.mxu0 0
    %1235 = vmatpush1.bf16.msra.mxu0 0
    %1236 = vmatprep.subr.bf16.mxu0 0
    %1237 = vmatpush1.bf16.msra.mxu0 0
    %1238 = vmatprep.subr.bf16.mxu0 0
    %1239 = vmatpush1.bf16.msra.mxu0 0
    %1240 = vmatprep.subr.bf16.mxu0 0
    %1241 = vmatpush1.bf16.msra.mxu0 0
    %1242 = vmatprep.subr.bf16.mxu0 0
    %1243 = vmatpush1.bf16.msra.mxu0 0
    %1244 = vmatprep.subr.bf16.mxu0 0
    %1245 = vmatpush1.bf16.msra.mxu0 0
    %1246 = vmatprep.subr.bf16.mxu0 0
    %1247 = vmatpush1.bf16.msra.mxu0 0
    %1248 = vmatprep.mubr.bf16.mxu0 0
    %1249 = vmatmul.mubr.bf16.gmra.mrb[0].mxu0 %v1014
    %v1250 = vpop.f32.mrb[0].mxu0
    %v1251 = vadd.f32 %v742, %v1250
    %v1252 = vpop.f32.mrb[0].mxu0
    %v1253 = vadd.f32 %v744, %v1252
    %v1254 = vpop.f32.mrb[0].mxu0
    %v1255 = vpop.f32.mrb[0].mxu0
    %1256 = vdwg.mxu0
    %v1258 = vlaneseq
    %v1259 = vshrl.u32 %v1258, 7
    %v1260 = vsub.s32 0, %v1259
    %v1261 = vrot.slane %v749, %v1260
    %v1262 = vlaneseq
    %v1263 = vshrl.u32 %v1262, 7
    %v1264 = vsub.s32 1, %v1263
    %v1265 = vrot.slane %v749, %v1264
    %v1266 = vlaneseq
    %v1267 = vshrl.u32 %v1266, 7
    %v1268 = vsub.s32 2, %v1267
    %v1269 = vrot.slane %v749, %v1268
    %v1270 = vlaneseq
    %v1271 = vshrl.u32 %v1270, 7
    %v1272 = vsub.s32 3, %v1271
    %v1273 = vrot.slane %v749, %v1272
    %v1278 = vadd.f32 %v1210, %v1261
    %v1279 = vadd.f32 %v1212, %v1265
    %v1280 = vadd.f32 %v1251, %v1269
    %v1281 = vadd.f32 %v1253, %v1273
    %v1282 = vxor.u32 %v1278, 2147483648
    %v1283 = vmul.f32 %v1282, 1.442695
    %v1284 = vpow.pop %v1283
    %v1285 = vadd.f32 %v1284, 1.0
    %v1286 = vrcp.pop %v1285
    %v1287 = vmul.f32 1.0, %v1286
    %v1288 = vxor.u32 %v1279, 2147483648
    %v1289 = vmul.f32 %v1288, 1.442695
    %v1290 = vpow.pop %v1289
    %v1291 = vadd.f32 %v1290, 1.0
    %v1292 = vrcp.pop %v1291
    %v1293 = vmul.f32 1.0, %v1292
    %v1294 = vtanh.pop %v1280
    %v1295 = vxor.u32 %v1281, 2147483648
    %v1296 = vmul.f32 %v1295, 1.442695
    %v1297 = vpow.pop %v1296
    %v1298 = vadd.f32 %v1297, 1.0
    %v1299 = vrcp.pop %v1298
    %v1300 = vmul.f32 1.0, %v1299
    %v1301 = vmul.f32 %v1293, %v197
    %v1302 = vmul.f32 %v1287, %v1294
    %v1303 = vadd.f32 %v1301, %v1302
    %v1304 = vtanh.pop %v1303
    %v1305 = vmul.f32 %v1300, %v1304
    %1306 = vst [vmem:[#allocation15] sm:$0xff] %v981
    %1307 = vst [vmem:[#allocation17] sm:$0xff] %v979
    %s1308 = scalar_lea.vmem [#allocation15], 8
    %1309 = vst [vmem:[%s1308] sm:$0xff] %v1305
    %s1310 = scalar_lea.vmem [#allocation17], 8
    %1311 = vst [vmem:[%s1310] sm:$0xff] %v1303
    %v1312 = vpack.c.bf16 %v1305, %v1305
    %v1313 = vld [vmem:[%s9] sm:$0xf]
    %v1314 = vld [vmem:[%s9 + $0x4] sm:$0xf]
    %v1315 = vld [vmem:[%s9 + $0x8] sm:$0xf]
    %v1316 = vld [vmem:[%s9 + $0xc] sm:$0xf]
    %v1317 = vld [vmem:[%s9 + $0x10] sm:$0xf]
    %v1318 = vld [vmem:[%s9 + $0x14] sm:$0xf]
    %v1319 = vld [vmem:[%s9 + $0x18] sm:$0xf]
    %v1320 = vld [vmem:[%s9 + $0x1c] sm:$0xf]
    %v1321 = vld [vmem:[%s9 + $0x20] sm:$0xf]
    %v1322 = vld [vmem:[%s9 + $0x24] sm:$0xf]
    %v1323 = vld [vmem:[%s9 + $0x28] sm:$0xf]
    %v1324 = vld [vmem:[%s9 + $0x2c] sm:$0xf]
    %v1325 = vld [vmem:[%s9 + $0x30] sm:$0xf]
    %v1326 = vld [vmem:[%s9 + $0x34] sm:$0xf]
    %v1327 = vld [vmem:[%s9 + $0x38] sm:$0xf]
    %v1328 = vld [vmem:[%s9 + $0x3c] sm:$0xf]
    %v1329 = vld [vmem:[#allocation13] sm:$0x1]
    %v1331 = vlaneseq
    %v1332 = vshrl.u32 %v1331, 7
    %v1333 = vsub.s32 0, %v1332
    %v1334 = vrot.slane %v1329, %v1333
    %v1352 = vunpack.c.l.b16 %v1313
    %v1353 = vunpack.c.l.b16 %v1314
    %v1354 = vunpack.c.l.b16 %v1315
    %v1355 = vunpack.c.l.b16 %v1316
    %v1356 = vunpack.c.l.b16 %v1317
    %v1357 = vunpack.c.l.b16 %v1318
    %v1358 = vunpack.c.l.b16 %v1319
    %v1359 = vunpack.c.l.b16 %v1320
    %v1360 = vunpack.c.l.b16 %v1321
    %v1361 = vunpack.c.l.b16 %v1322
    %v1362 = vunpack.c.l.b16 %v1323
    %v1363 = vunpack.c.l.b16 %v1324
    %v1364 = vunpack.c.l.b16 %v1325
    %v1365 = vunpack.c.l.b16 %v1326
    %v1366 = vunpack.c.l.b16 %v1327
    %v1367 = vunpack.c.l.b16 %v1328
    %v1368 = vpack.c.b16 %v1353, %v1352
    %v1369 = vpack.c.b16 %v1355, %v1354
    %v1370 = vpack.c.b16 %v1357, %v1356
    %v1371 = vpack.c.b16 %v1359, %v1358
    %v1372 = vpack.c.b16 %v1361, %v1360
    %v1373 = vpack.c.b16 %v1363, %v1362
    %v1374 = vpack.c.b16 %v1365, %v1364
    %v1375 = vpack.c.b16 %v1367, %v1366
    %1384 = vmatprep.subr.bf16.mxu0 0
    %1385 = vmatpush1.bf16.msra.mxu0 %v1368
    %1386 = vmatprep.subr.bf16.mxu0 0
    %1387 = vmatpush1.bf16.msra.mxu0 %v1369
    %1388 = vmatprep.subr.bf16.mxu0 0
    %1389 = vmatpush1.bf16.msra.mxu0 %v1370
    %1390 = vmatprep.subr.bf16.mxu0 0
    %1391 = vmatpush1.bf16.msra.mxu0 %v1371
    %1392 = vmatprep.subr.bf16.mxu0 0
    %1393 = vmatpush1.bf16.msra.mxu0 %v1372
    %1394 = vmatprep.subr.bf16.mxu0 0
    %1395 = vmatpush1.bf16.msra.mxu0 %v1373
    %1396 = vmatprep.subr.bf16.mxu0 0
    %1397 = vmatpush1.bf16.msra.mxu0 %v1374
    %1398 = vmatprep.subr.bf16.mxu0 0
    %1399 = vmatpush1.bf16.msra.mxu0 %v1375
    %1400 = vmatprep.subr.bf16.mxu0 0
    %1401 = vmatpush1.bf16.msra.mxu0 0
    %1402 = vmatprep.subr.bf16.mxu0 0
    %1403 = vmatpush1.bf16.msra.mxu0 0
    %1404 = vmatprep.subr.bf16.mxu0 0
    %1405 = vmatpush1.bf16.msra.mxu0 0
    %1406 = vmatprep.subr.bf16.mxu0 0
    %1407 = vmatpush1.bf16.msra.mxu0 0
    %1408 = vmatprep.subr.bf16.mxu0 0
    %1409 = vmatpush1.bf16.msra.mxu0 0
    %1410 = vmatprep.subr.bf16.mxu0 0
    %1411 = vmatpush1.bf16.msra.mxu0 0
    %1412 = vmatprep.subr.bf16.mxu0 0
    %1413 = vmatpush1.bf16.msra.mxu0 0
    %1414 = vmatprep.subr.bf16.mxu0 0
    %1415 = vmatpush1.bf16.msra.mxu0 0
    %1416 = vmatprep.mubr.bf16.mxu0 0
    %1417 = vmatmul.mubr.bf16.gmra.mrb[0].mxu0 %v1312
    %v1418 = vpop.f32.mrb[0].mxu0
    %v1419 = vadd.f32 %v1334, %v1418
    %v1420 = vpop.f32.mrb[0].mxu0
    %v1421 = vpop.f32.mrb[0].mxu0
    %v1422 = vpop.f32.mrb[0].mxu0
    %1423 = vdwg.mxu0
    %1424 = vst.msk [vmem:[#allocation14] sm:$0xff] %vm145, %v1419
    // Predicated region
    $region74: #{decoder_forward.1} parent=1 // pred_check
      _
    $region75: #{decoder_forward.1} parent=1 // pred_check_branch
      %1426 = sbr.rel (0) target = $region77
    $region76: #{decoder_forward.1} parent=1 // pred_region
      %s1428 = ssub.s32 128, 128
      %1429 = vsyncadd [#allocation4], %s1428
      %s1431 = sshll.u32 [#allocation14], 4
      %s1432 = int_to_ptr.vmem [resolvable:$true] %s1431
      %1434 = dma.vmem_to_hbm [thread:$0]  %s1432, 128, %s11, [#allocation4]
    $region77: #{decoder_forward.1} parent=1 // pred_fallthru
      _
    // Predicated region
    $region78: #{decoder_forward.1} parent=1 // pred_check
      _
    $region79: #{decoder_forward.1} parent=1 // pred_check_branch
      %1436 = sbr.rel (0) target = $region81
    $region80: #{decoder_forward.1} parent=1 // pred_region
      %s1438 = ssub.s32 256, 256
      %1439 = vsyncadd [#allocation16], %s1438
      %s1440 = sshll.u32 [#allocation15], 4
      %s1441 = int_to_ptr.vmem [resolvable:$true] %s1440
      %1446 = dma.vmem_to_hbm [thread:$0]  %s1441, 256, %s12, [#allocation16], 128, 128, 8
    $region81: #{decoder_forward.1} parent=1 // pred_fallthru
      _
    // Predicated region
    $region82: #{decoder_forward.1} parent=1 // pred_check
      _
    $region83: #{decoder_forward.1} parent=1 // pred_check_branch
      %1448 = sbr.rel (0) target = $region85
    $region84: #{decoder_forward.1} parent=1 // pred_region
      %s1450 = ssub.s32 256, 256
      %1451 = vsyncadd [#allocation16], %s1450
      %s1452 = sshll.u32 [#allocation17], 4
      %s1453 = int_to_ptr.vmem [resolvable:$true] %s1452
      %1458 = dma.vmem_to_hbm [thread:$0]  %s1453, 256, %s13, [#allocation16], 128, 128, 8
    $region85: #{decoder_forward.1} parent=1 // pred_fallthru
      _
    // Predicated region
    $region86: #{decoder_forward.1} parent=1 // pred_check
      _
    $region87: #{decoder_forward.1} parent=1 // pred_check_branch
      %1460 = sbr.rel (0) target = $region89
    $region88: #{decoder_forward.1} parent=1 // pred_region
      %1461 = dma.done [#allocation4], 128
    $region89: #{decoder_forward.1} parent=1 // pred_fallthru
      _
    // Predicated region
    $region90: #{decoder_forward.1} parent=1 // pred_check
      _
    $region91: #{decoder_forward.1} parent=1 // pred_check_branch
      %1463 = sbr.rel (0) target = $region93
    $region92: #{decoder_forward.1} parent=1 // pred_region
      %1464 = dma.done [#allocation16], 256
    $region93: #{decoder_forward.1} parent=1 // pred_fallthru
      _
    // Predicated region
    $region94: #{decoder_forward.1} parent=1 // pred_check
      _
    $region95: #{decoder_forward.1} parent=1 // pred_check_branch
      %1466 = sbr.rel (0) target = $region97
    $region96: #{decoder_forward.1} parent=1 // pred_region
      %1467 = dma.done [#allocation16], 256
    $region97: #{decoder_forward.1} parent=1 // pred_fallthru
      _
    %1468 = vsyncpa [#allocation3], 1
    %1469 = vsyncpa [#allocation6], 1
    %1470 = vsyncpa [#allocation9], 1
    %1471 = vsyncpa [#allocation12], 1
    %1472 = vsyncpa [#allocation4], 1
    %1473 = vsyncpa [#allocation16], 1

</llo_original>
